<compile_context>
chip_gen: v5e
topology: v5e:2x2
jax: 0.10.0
libtpu: 0.0.40
codegen_flags: <defaults>
</compile_context>

<pallas_src>
import jax
import jax.numpy as jnp
from jax import lax
from jax.experimental import pallas as pl
from jax.experimental.pallas import tpu as pltpu


MM_DTYPE = jnp.bfloat16   # MXU operand dtype (accumulation stays f32)
B_BLK = 8                 # f32 sublane tile; one batch block per grid step


def _reorder_gates(w):
    """PyTorch gate order [i, f, g, o] -> kernel order [i, f, o, g] (axis 0)."""
    i_, f_, g_, o_ = jnp.split(w, 4, axis=0)
    return jnp.concatenate([i_, f_, o_, g_], axis=0)


def _const_index_map(ndim):
    return lambda bi: (0,) * ndim


def lstm_forward(x, params):
    T, B, I = x.shape
    L = len(params["w_hh"])
    H = params["w_hh"][0].shape[1]
    O = params["w_dec"].shape[0]

    # ---- host-side glue: pad batch, reorder / transpose / cast weights ----
    B_pad = ((B + B_BLK - 1) // B_BLK) * B_BLK
    if B_pad != B:
        x = jnp.pad(x, ((0, 0), (0, B_pad - B), (0, 0)))
    n_b = B_pad // B_BLK

    w_ih0_t = _reorder_gates(params["w_ih"][0]).T.astype(MM_DTYPE)        # (I, 4H)
    w_hh_t = jnp.stack([_reorder_gates(params["w_hh"][l]).T
                        for l in range(L)]).astype(MM_DTYPE)              # (L, H, 4H)
    b = jnp.stack([_reorder_gates(params["b_ih"][l] + params["b_hh"][l]
                                  ).reshape(1, 4 * H)
                   for l in range(L)]).astype(jnp.float32)                # (L, 1, 4H)
    w_dec_t = params["w_dec"].T.astype(jnp.float32)                       # (H, O)
    b_dec = params["b_dec"].reshape(1, O).astype(jnp.float32)             # (1, O)

    operands = [x, w_ih0_t]
    if L > 1:
        w_ihR_t = jnp.stack([_reorder_gates(params["w_ih"][l]).T
                             for l in range(1, L)]).astype(MM_DTYPE)      # (L-1, H, 4H)
        operands.append(w_ihR_t)
    operands += [w_hh_t, b, w_dec_t, b_dec]

    unroll = True if T <= 32 else 8

    # ---- kernel (all shapes static via closure) ----
    def kernel(*args):
        if L > 1:
            (x_ref, w_ih0_ref, w_ihR_ref, w_hh_ref, b_ref,
             w_dec_ref, b_dec_ref, out_ref, seq_buf, gx_buf) = args
        else:
            (x_ref, w_ih0_ref, w_hh_ref, b_ref,
             w_dec_ref, b_dec_ref, out_ref, gx_buf) = args
            w_ihR_ref = None
            seq_buf = None

        h_last = jnp.zeros((B_BLK, H), MM_DTYPE)
        for l in range(L):                       # static layer loop
            w_hh = w_hh_ref[l]                   # (H, 4H)  bf16
            bias = b_ref[l]                      # (1, 4H)  f32

            # Hoisted input projection: one (T*B, in) @ (in, 4H) matmul,
            # completely off the serial h-dependency critical path.
            if l == 0:
                seq_in = x_ref[...].astype(MM_DTYPE).reshape(T * B_BLK, I)
                w_in = w_ih0_ref[...]
            else:
                seq_in = seq_buf[...].reshape(T * B_BLK, H)   # already bf16
                w_in = w_ihR_ref[l - 1]
            gx = jnp.dot(seq_in, w_in, preferred_element_type=jnp.float32)
            gx_buf[...] = (gx + bias).reshape(T, B_BLK, 4 * H)

            def step(t, carry, _l=l, _w_hh=w_hh):
                h_bf, c = carry                  # h bf16, c f32
                gates = (jnp.dot(h_bf, _w_hh,
                                 preferred_element_type=jnp.float32)
                         + gx_buf[t])
                # gate columns are [i, f, o | g]: two fused EUP calls.
                sig = jax.nn.sigmoid(gates[:, :3 * H])
                i_g = sig[:, 0:H]
                f_g = sig[:, H:2 * H]
                o_g = sig[:, 2 * H:3 * H]
                g_g = jnp.tanh(gates[:, 3 * H:])
                c_new = f_g * c + i_g * g_g
                h_new = (o_g * jnp.tanh(c_new)).astype(MM_DTYPE)
                if _l < L - 1:                   # top layer's sequence unused
                    seq_buf[t] = h_new
                return (h_new, c_new)

            h0 = jnp.zeros((B_BLK, H), MM_DTYPE)
            c0 = jnp.zeros((B_BLK, H), jnp.float32)
            h_last, _ = lax.fori_loop(0, T, step, (h0, c0), unroll=unroll)

        # decoder on output[-1] == last hidden of top layer (tiny; f32 matmul)
        out_ref[...] = (jnp.dot(h_last.astype(jnp.float32), w_dec_ref[...],
                                preferred_element_type=jnp.float32)
                        + b_dec_ref[...])

    def full_spec(a):
        return pl.BlockSpec(a.shape, _const_index_map(a.ndim))

    in_specs = ([pl.BlockSpec((T, B_BLK, I), lambda bi: (0, bi, 0))]
                + [full_spec(a) for a in operands[1:]])
    out_spec = pl.BlockSpec((B_BLK, O), lambda bi: (bi, 0))

    scratch_shapes = []
    if L > 1:
        scratch_shapes.append(pltpu.VMEM((T, B_BLK, H), MM_DTYPE))        # seq_buf
    scratch_shapes.append(pltpu.VMEM((T, B_BLK, 4 * H), jnp.float32))     # gates_x

    y = pl.pallas_call(
        kernel,
        out_shape=jax.ShapeDtypeStruct((B_pad, O), jnp.float32),
        grid=(n_b,),
        in_specs=in_specs,
        out_specs=out_spec,
        scratch_shapes=scratch_shapes,
        compiler_params=pltpu.CompilerParams(
            dimension_semantics=("parallel",)),
    )(*operands)
    # TODO(synk): for production T/H, stream x and per-layer weights with a
    # T-chunked pipelined grid instead of holding everything in VMEM (needed
    # to fit v7x's 64 MiB VMEM); toy sizes here are fully resident.
    return y[:B]


def init_params(key, I, H, O, L):
    """Deterministic init, same scheme as PyTorch (U(-1/sqrt(H), 1/sqrt(H)))."""
    stdv = 1.0 / (H ** 0.5)
    params = {"w_ih": [], "w_hh": [], "b_ih": [], "b_hh": []}
    for l in range(L):
        in_dim = I if l == 0 else H
        key, k1, k2, k3, k4 = jax.random.split(key, 5)
        params["w_ih"].append(jax.random.uniform(k1, (4 * H, in_dim), jnp.float32, -stdv, stdv))
        params["w_hh"].append(jax.random.uniform(k2, (4 * H, H), jnp.float32, -stdv, stdv))
        params["b_ih"].append(jax.random.uniform(k3, (4 * H,), jnp.float32, -stdv, stdv))
        params["b_hh"].append(jax.random.uniform(k4, (4 * H,), jnp.float32, -stdv, stdv))
    key, k5, k6 = jax.random.split(key, 3)
    params["w_dec"] = jax.random.uniform(k5, (O, H), jnp.float32, -stdv, stdv)
    params["b_dec"] = jax.random.uniform(k6, (O,), jnp.float32, -stdv, stdv)
    return params


def lstm_reference(x, params):
    """Pure-JAX f32 reference mirroring torch nn.LSTM + Linear semantics."""
    T, B, _ = x.shape
    L = len(params["w_hh"])
    H = params["w_hh"][0].shape[1]
    seq = x
    for l in range(L):
        h = jnp.zeros((B, H), jnp.float32)
        c = jnp.zeros((B, H), jnp.float32)
        outs = []
        for t in range(T):
            gates = (seq[t] @ params["w_ih"][l].T + h @ params["w_hh"][l].T
                     + params["b_ih"][l] + params["b_hh"][l])
            i_g = jax.nn.sigmoid(gates[:, 0:H])
            f_g = jax.nn.sigmoid(gates[:, H:2 * H])
            g_g = jnp.tanh(gates[:, 2 * H:3 * H])
            o_g = jax.nn.sigmoid(gates[:, 3 * H:4 * H])
            c = f_g * c + i_g * g_g
            h = o_g * jnp.tanh(c)
            outs.append(h)
        seq = jnp.stack(outs)
    return seq[-1] @ params["w_dec"].T + params["b_dec"]


if __name__ == "__main__":
    SEQ, BATCH, INPUT, HIDDEN, OUTPUT, LAYERS = 8, 2, 16, 32, 8, 2

    key = jax.random.PRNGKey(0)
    key, kx = jax.random.split(key)
    params = init_params(key, INPUT, HIDDEN, OUTPUT, LAYERS)
    x = jax.random.normal(kx, (SEQ, BATCH, INPUT), jnp.float32)

    y = lstm_forward(x, params)
    jax.block_until_ready(y)

    y_ref = lstm_reference(x, params)
    assert y.shape == (BATCH, OUTPUT), y.shape
    max_err = float(jnp.max(jnp.abs(y - y_ref)))
    # bf16 MXU operands / bf16 hidden carry (f32 accumulation & cell state)
    # -> tolerance looser than pure-f32.
    assert jnp.allclose(y, y_ref, atol=2e-2, rtol=2e-2), max_err
    print("KERNEL_OK")
</pallas_src>

<mosaic_0001>
module attributes {stable_mosaic.version = 11 : i64} {
  func.func @kernel(%arg0: i32, %arg1: memref<8x8x16xf32, #tpu.memory_space<vmem>>, %arg2: memref<16x128xbf16, #tpu.memory_space<vmem>>, %arg3: memref<1x32x128xbf16, #tpu.memory_space<vmem>>, %arg4: memref<2x32x128xbf16, #tpu.memory_space<vmem>>, %arg5: memref<2x1x128xf32, #tpu.memory_space<vmem>>, %arg6: memref<32x8xf32, #tpu.memory_space<vmem>>, %arg7: memref<1x8xf32, #tpu.memory_space<vmem>>, %arg8: memref<8x8xf32, #tpu.memory_space<vmem>>, %arg9: memref<8x8x32xbf16, #tpu.memory_space<vmem>>, %arg10: memref<8x8x128xf32, #tpu.memory_space<vmem>>) attributes {dimension_semantics = [#tpu.dimension_semantics<parallel>], iteration_bounds = array<i64: 1>, scalar_prefetch = 0 : i64, scratch_operands = 2 : i64, tpu.core_type = #tpu.core_type<tc>, window_params = [{transform_indices = @transform_0, window_bounds = array<i64: 8, 8, 16>}, {pipeline_mode = #tpu.pipeline_mode<synchronous>, transform_indices = @transform_1, window_bounds = array<i64: 16, 128>}, {pipeline_mode = #tpu.pipeline_mode<synchronous>, transform_indices = @transform_2, window_bounds = array<i64: 1, 32, 128>}, {pipeline_mode = #tpu.pipeline_mode<synchronous>, transform_indices = @transform_3, window_bounds = array<i64: 2, 32, 128>}, {pipeline_mode = #tpu.pipeline_mode<synchronous>, transform_indices = @transform_4, window_bounds = array<i64: 2, 1, 128>}, {pipeline_mode = #tpu.pipeline_mode<synchronous>, transform_indices = @transform_5, window_bounds = array<i64: 32, 8>}, {pipeline_mode = #tpu.pipeline_mode<synchronous>, transform_indices = @transform_6, window_bounds = array<i64: 1, 8>}, {transform_indices = @transform_7, window_bounds = array<i64: 8, 8>}]} {
    %c0 = arith.constant 0 : index
    %c0_0 = arith.constant 0 : index
    %c0_1 = arith.constant 0 : index
    %0 = vector.load %arg4[%c0, %c0_0, %c0_1] : memref<2x32x128xbf16, #tpu.memory_space<vmem>>, vector<1x32x128xbf16>
    %1 = vector.shape_cast %0 : vector<1x32x128xbf16> to vector<32x128xbf16>
    %c0_2 = arith.constant 0 : index
    %c0_3 = arith.constant 0 : index
    %c0_4 = arith.constant 0 : index
    %2 = vector.load %arg5[%c0_2, %c0_3, %c0_4] : memref<2x1x128xf32, #tpu.memory_space<vmem>>, vector<1x1x128xf32>
    %3 = vector.shape_cast %2 : vector<1x1x128xf32> to vector<1x128xf32>
    %c0_5 = arith.constant 0 : index
    %c0_6 = arith.constant 0 : index
    %c0_7 = arith.constant 0 : index
    %4 = vector.load %arg1[%c0_5, %c0_6, %c0_7] : memref<8x8x16xf32, #tpu.memory_space<vmem>>, vector<8x8x16xf32>
    %5 = arith.truncf %4 : vector<8x8x16xf32> to vector<8x8x16xbf16>
    %6 = vector.shape_cast %5 : vector<8x8x16xbf16> to vector<64x16xbf16>
    %c0_8 = arith.constant 0 : index
    %c0_9 = arith.constant 0 : index
    %7 = vector.load %arg2[%c0_8, %c0_9] : memref<16x128xbf16, #tpu.memory_space<vmem>>, vector<16x128xbf16>
    %cst = arith.constant dense<0.000000e+00> : vector<64x128xf32>
    %8 = tpu.matmul %6, %7, %cst {dimension_numbers = #tpu.dot_dimension_numbers<[1], [0], [0], [1], [0, 0, 1, 1], [], []>} : vector<64x16xbf16>, vector<16x128xbf16>, vector<64x128xf32> -> vector<64x128xf32>
    %9 = vector.broadcast %3 : vector<1x128xf32> to vector<64x128xf32>
    %10 = arith.addf %8, %9 : vector<64x128xf32>
    %11 = vector.shape_cast %10 : vector<64x128xf32> to vector<8x8x128xf32>
    %c0_10 = arith.constant 0 : index
    %c0_11 = arith.constant 0 : index
    %c0_12 = arith.constant 0 : index
    %12 = vector.load %arg10[%c0_10, %c0_11, %c0_12] : memref<8x8x128xf32, #tpu.memory_space<vmem>>, vector<8x8x128xf32>
    tpu.vector_store %arg10[%c0_10, %c0_11, %c0_12], %11 {strides = array<i32>} : memref<8x8x128xf32, #tpu.memory_space<vmem>>, vector<8x8x128xf32>,
    %cst_13 = arith.constant 0.000000e+00 : bf16
    %13 = vector.broadcast %cst_13 : bf16 to vector<8x32xbf16>
    %cst_14 = arith.constant 0.000000e+00 : f32
    %14 = vector.broadcast %cst_14 : f32 to vector<8x32xf32>
    %c0_i32 = arith.constant 0 : i32
    %cst_15 = arith.constant dense<0.000000e+00> : vector<8x128xf32>
    %15 = tpu.matmul %13, %1, %cst_15 {dimension_numbers = #tpu.dot_dimension_numbers<[1], [0], [0], [1], [0, 0, 1, 1], [], []>} : vector<8x32xbf16>, vector<32x128xbf16>, vector<8x128xf32> -> vector<8x128xf32>
    %16 = arith.index_cast %c0_i32 : i32 to index
    %c0_16 = arith.constant 0 : index
    %c0_17 = arith.constant 0 : index
    %17 = vector.load %arg10[%16, %c0_16, %c0_17] : memref<8x8x128xf32, #tpu.memory_space<vmem>>, vector<1x8x128xf32>
    %18 = vector.shape_cast %17 : vector<1x8x128xf32> to vector<8x128xf32>
    %19 = arith.addf %15, %18 : vector<8x128xf32>
    %20 = vector.extract_strided_slice %19 {offsets = [0, 0], sizes = [8, 96], strides = [1, 1]} : vector<8x128xf32> to vector<8x96xf32>
    %21 = arith.negf %20 : vector<8x96xf32>
    %22 = math.exp %21 : vector<8x96xf32>
    %cst_18 = arith.constant 1.000000e+00 : f32
    %23 = vector.broadcast %cst_18 : f32 to vector<8x96xf32>
    %24 = arith.addf %23, %22 : vector<8x96xf32>
    %25 = arith.divf %23, %24 : vector<8x96xf32>
    %26 = vector.extract_strided_slice %25 {offsets = [0, 0], sizes = [8, 32], strides = [1, 1]} : vector<8x96xf32> to vector<8x32xf32>
    %27 = vector.extract_strided_slice %25 {offsets = [0, 32], sizes = [8, 32], strides = [1, 1]} : vector<8x96xf32> to vector<8x32xf32>
    %28 = vector.extract_strided_slice %25 {offsets = [0, 64], sizes = [8, 32], strides = [1, 1]} : vector<8x96xf32> to vector<8x32xf32>
    %29 = vector.extract_strided_slice %19 {offsets = [0, 96], sizes = [8, 32], strides = [1, 1]} : vector<8x128xf32> to vector<8x32xf32>
    %30 = math.tanh %29 : vector<8x32xf32>
    %31 = arith.mulf %27, %14 : vector<8x32xf32>
    %32 = arith.mulf %26, %30 : vector<8x32xf32>
    %33 = arith.addf %31, %32 : vector<8x32xf32>
    %34 = math.tanh %33 : vector<8x32xf32>
    %35 = arith.mulf %28, %34 : vector<8x32xf32>
    %36 = arith.truncf %35 : vector<8x32xf32> to vector<8x32xbf16>
    %37 = arith.index_cast %c0_i32 : i32 to index
    %c0_19 = arith.constant 0 : index
    %c0_20 = arith.constant 0 : index
    %38 = vector.load %arg9[%37, %c0_19, %c0_20] : memref<8x8x32xbf16, #tpu.memory_space<vmem>>, vector<1x8x32xbf16>
    %39 = vector.shape_cast %38 : vector<1x8x32xbf16> to vector<8x32xbf16>
    %40 = vector.shape_cast %36 : vector<8x32xbf16> to vector<1x8x32xbf16>
    tpu.vector_store %arg9[%37, %c0_19, %c0_20], %40 {strides = array<i32>} : memref<8x8x32xbf16, #tpu.memory_space<vmem>>, vector<1x8x32xbf16>,
    %c1_i32 = arith.constant 1 : i32
    %cst_21 = arith.constant dense<0.000000e+00> : vector<8x128xf32>
    %41 = tpu.matmul %36, %1, %cst_21 {dimension_numbers = #tpu.dot_dimension_numbers<[1], [0], [0], [1], [0, 0, 1, 1], [], []>} : vector<8x32xbf16>, vector<32x128xbf16>, vector<8x128xf32> -> vector<8x128xf32>
    %42 = arith.index_cast %c1_i32 : i32 to index
    %c0_22 = arith.constant 0 : index
    %c0_23 = arith.constant 0 : index
    %43 = vector.load %arg10[%42, %c0_22, %c0_23] : memref<8x8x128xf32, #tpu.memory_space<vmem>>, vector<1x8x128xf32>
    %44 = vector.shape_cast %43 : vector<1x8x128xf32> to vector<8x128xf32>
    %45 = arith.addf %41, %44 : vector<8x128xf32>
    %46 = vector.extract_strided_slice %45 {offsets = [0, 0], sizes = [8, 96], strides = [1, 1]} : vector<8x128xf32> to vector<8x96xf32>
    %47 = arith.negf %46 : vector<8x96xf32>
    %48 = math.exp %47 : vector<8x96xf32>
    %cst_24 = arith.constant 1.000000e+00 : f32
    %49 = vector.broadcast %cst_24 : f32 to vector<8x96xf32>
    %50 = arith.addf %49, %48 : vector<8x96xf32>
    %51 = arith.divf %49, %50 : vector<8x96xf32>
    %52 = vector.extract_strided_slice %51 {offsets = [0, 0], sizes = [8, 32], strides = [1, 1]} : vector<8x96xf32> to vector<8x32xf32>
    %53 = vector.extract_strided_slice %51 {offsets = [0, 32], sizes = [8, 32], strides = [1, 1]} : vector<8x96xf32> to vector<8x32xf32>
    %54 = vector.extract_strided_slice %51 {offsets = [0, 64], sizes = [8, 32], strides = [1, 1]} : vector<8x96xf32> to vector<8x32xf32>
    %55 = vector.extract_strided_slice %45 {offsets = [0, 96], sizes = [8, 32], strides = [1, 1]} : vector<8x128xf32> to vector<8x32xf32>
    %56 = math.tanh %55 : vector<8x32xf32>
    %57 = arith.mulf %53, %33 : vector<8x32xf32>
    %58 = arith.mulf %52, %56 : vector<8x32xf32>
    %59 = arith.addf %57, %58 : vector<8x32xf32>
    %60 = math.tanh %59 : vector<8x32xf32>
    %61 = arith.mulf %54, %60 : vector<8x32xf32>
    %62 = arith.truncf %61 : vector<8x32xf32> to vector<8x32xbf16>
    %63 = arith.index_cast %c1_i32 : i32 to index
    %c0_25 = arith.constant 0 : index
    %c0_26 = arith.constant 0 : index
    %64 = vector.load %arg9[%63, %c0_25, %c0_26] : memref<8x8x32xbf16, #tpu.memory_space<vmem>>, vector<1x8x32xbf16>
    %65 = vector.shape_cast %64 : vector<1x8x32xbf16> to vector<8x32xbf16>
    %66 = vector.shape_cast %62 : vector<8x32xbf16> to vector<1x8x32xbf16>
    tpu.vector_store %arg9[%63, %c0_25, %c0_26], %66 {strides = array<i32>} : memref<8x8x32xbf16, #tpu.memory_space<vmem>>, vector<1x8x32xbf16>,
    %c2_i32 = arith.constant 2 : i32
    %cst_27 = arith.constant dense<0.000000e+00> : vector<8x128xf32>
    %67 = tpu.matmul %62, %1, %cst_27 {dimension_numbers = #tpu.dot_dimension_numbers<[1], [0], [0], [1], [0, 0, 1, 1], [], []>} : vector<8x32xbf16>, vector<32x128xbf16>, vector<8x128xf32> -> vector<8x128xf32>
    %68 = arith.index_cast %c2_i32 : i32 to index
    %c0_28 = arith.constant 0 : index
    %c0_29 = arith.constant 0 : index
    %69 = vector.load %arg10[%68, %c0_28, %c0_29] : memref<8x8x128xf32, #tpu.memory_space<vmem>>, vector<1x8x128xf32>
    %70 = vector.shape_cast %69 : vector<1x8x128xf32> to vector<8x128xf32>
    %71 = arith.addf %67, %70 : vector<8x128xf32>
    %72 = vector.extract_strided_slice %71 {offsets = [0, 0], sizes = [8, 96], strides = [1, 1]} : vector<8x128xf32> to vector<8x96xf32>
    %73 = arith.negf %72 : vector<8x96xf32>
    %74 = math.exp %73 : vector<8x96xf32>
    %cst_30 = arith.constant 1.000000e+00 : f32
    %75 = vector.broadcast %cst_30 : f32 to vector<8x96xf32>
    %76 = arith.addf %75, %74 : vector<8x96xf32>
    %77 = arith.divf %75, %76 : vector<8x96xf32>
    %78 = vector.extract_strided_slice %77 {offsets = [0, 0], sizes = [8, 32], strides = [1, 1]} : vector<8x96xf32> to vector<8x32xf32>
    %79 = vector.extract_strided_slice %77 {offsets = [0, 32], sizes = [8, 32], strides = [1, 1]} : vector<8x96xf32> to vector<8x32xf32>
    %80 = vector.extract_strided_slice %77 {offsets = [0, 64], sizes = [8, 32], strides = [1, 1]} : vector<8x96xf32> to vector<8x32xf32>
    %81 = vector.extract_strided_slice %71 {offsets = [0, 96], sizes = [8, 32], strides = [1, 1]} : vector<8x128xf32> to vector<8x32xf32>
    %82 = math.tanh %81 : vector<8x32xf32>
    %83 = arith.mulf %79, %59 : vector<8x32xf32>
    %84 = arith.mulf %78, %82 : vector<8x32xf32>
    %85 = arith.addf %83, %84 : vector<8x32xf32>
    %86 = math.tanh %85 : vector<8x32xf32>
    %87 = arith.mulf %80, %86 : vector<8x32xf32>
    %88 = arith.truncf %87 : vector<8x32xf32> to vector<8x32xbf16>
    %89 = arith.index_cast %c2_i32 : i32 to index
    %c0_31 = arith.constant 0 : index
    %c0_32 = arith.constant 0 : index
    %90 = vector.load %arg9[%89, %c0_31, %c0_32] : memref<8x8x32xbf16, #tpu.memory_space<vmem>>, vector<1x8x32xbf16>
    %91 = vector.shape_cast %90 : vector<1x8x32xbf16> to vector<8x32xbf16>
    %92 = vector.shape_cast %88 : vector<8x32xbf16> to vector<1x8x32xbf16>
    tpu.vector_store %arg9[%89, %c0_31, %c0_32], %92 {strides = array<i32>} : memref<8x8x32xbf16, #tpu.memory_space<vmem>>, vector<1x8x32xbf16>,
    %c3_i32 = arith.constant 3 : i32
    %cst_33 = arith.constant dense<0.000000e+00> : vector<8x128xf32>
    %93 = tpu.matmul %88, %1, %cst_33 {dimension_numbers = #tpu.dot_dimension_numbers<[1], [0], [0], [1], [0, 0, 1, 1], [], []>} : vector<8x32xbf16>, vector<32x128xbf16>, vector<8x128xf32> -> vector<8x128xf32>
    %94 = arith.index_cast %c3_i32 : i32 to index
    %c0_34 = arith.constant 0 : index
    %c0_35 = arith.constant 0 : index
    %95 = vector.load %arg10[%94, %c0_34, %c0_35] : memref<8x8x128xf32, #tpu.memory_space<vmem>>, vector<1x8x128xf32>
    %96 = vector.shape_cast %95 : vector<1x8x128xf32> to vector<8x128xf32>
    %97 = arith.addf %93, %96 : vector<8x128xf32>
    %98 = vector.extract_strided_slice %97 {offsets = [0, 0], sizes = [8, 96], strides = [1, 1]} : vector<8x128xf32> to vector<8x96xf32>
    %99 = arith.negf %98 : vector<8x96xf32>
    %100 = math.exp %99 : vector<8x96xf32>
    %cst_36 = arith.constant 1.000000e+00 : f32
    %101 = vector.broadcast %cst_36 : f32 to vector<8x96xf32>
    %102 = arith.addf %101, %100 : vector<8x96xf32>
    %103 = arith.divf %101, %102 : vector<8x96xf32>
    %104 = vector.extract_strided_slice %103 {offsets = [0, 0], sizes = [8, 32], strides = [1, 1]} : vector<8x96xf32> to vector<8x32xf32>
    %105 = vector.extract_strided_slice %103 {offsets = [0, 32], sizes = [8, 32], strides = [1, 1]} : vector<8x96xf32> to vector<8x32xf32>
    %106 = vector.extract_strided_slice %103 {offsets = [0, 64], sizes = [8, 32], strides = [1, 1]} : vector<8x96xf32> to vector<8x32xf32>
    %107 = vector.extract_strided_slice %97 {offsets = [0, 96], sizes = [8, 32], strides = [1, 1]} : vector<8x128xf32> to vector<8x32xf32>
    %108 = math.tanh %107 : vector<8x32xf32>
    %109 = arith.mulf %105, %85 : vector<8x32xf32>
    %110 = arith.mulf %104, %108 : vector<8x32xf32>
    %111 = arith.addf %109, %110 : vector<8x32xf32>
    %112 = math.tanh %111 : vector<8x32xf32>
    %113 = arith.mulf %106, %112 : vector<8x32xf32>
    %114 = arith.truncf %113 : vector<8x32xf32> to vector<8x32xbf16>
    %115 = arith.index_cast %c3_i32 : i32 to index
    %c0_37 = arith.constant 0 : index
    %c0_38 = arith.constant 0 : index
    %116 = vector.load %arg9[%115, %c0_37, %c0_38] : memref<8x8x32xbf16, #tpu.memory_space<vmem>>, vector<1x8x32xbf16>
    %117 = vector.shape_cast %116 : vector<1x8x32xbf16> to vector<8x32xbf16>
    %118 = vector.shape_cast %114 : vector<8x32xbf16> to vector<1x8x32xbf16>
    tpu.vector_store %arg9[%115, %c0_37, %c0_38], %118 {strides = array<i32>} : memref<8x8x32xbf16, #tpu.memory_space<vmem>>, vector<1x8x32xbf16>,
    %c4_i32 = arith.constant 4 : i32
    %cst_39 = arith.constant dense<0.000000e+00> : vector<8x128xf32>
    %119 = tpu.matmul %114, %1, %cst_39 {dimension_numbers = #tpu.dot_dimension_numbers<[1], [0], [0], [1], [0, 0, 1, 1], [], []>} : vector<8x32xbf16>, vector<32x128xbf16>, vector<8x128xf32> -> vector<8x128xf32>
    %120 = arith.index_cast %c4_i32 : i32 to index
    %c0_40 = arith.constant 0 : index
    %c0_41 = arith.constant 0 : index
    %121 = vector.load %arg10[%120, %c0_40, %c0_41] : memref<8x8x128xf32, #tpu.memory_space<vmem>>, vector<1x8x128xf32>
    %122 = vector.shape_cast %121 : vector<1x8x128xf32> to vector<8x128xf32>
    %123 = arith.addf %119, %122 : vector<8x128xf32>
    %124 = vector.extract_strided_slice %123 {offsets = [0, 0], sizes = [8, 96], strides = [1, 1]} : vector<8x128xf32> to vector<8x96xf32>
    %125 = arith.negf %124 : vector<8x96xf32>
    %126 = math.exp %125 : vector<8x96xf32>
    %cst_42 = arith.constant 1.000000e+00 : f32
    %127 = vector.broadcast %cst_42 : f32 to vector<8x96xf32>
    %128 = arith.addf %127, %126 : vector<8x96xf32>
    %129 = arith.divf %127, %128 : vector<8x96xf32>
    %130 = vector.extract_strided_slice %129 {offsets = [0, 0], sizes = [8, 32], strides = [1, 1]} : vector<8x96xf32> to vector<8x32xf32>
    %131 = vector.extract_strided_slice %129 {offsets = [0, 32], sizes = [8, 32], strides = [1, 1]} : vector<8x96xf32> to vector<8x32xf32>
    %132 = vector.extract_strided_slice %129 {offsets = [0, 64], sizes = [8, 32], strides = [1, 1]} : vector<8x96xf32> to vector<8x32xf32>
    %133 = vector.extract_strided_slice %123 {offsets = [0, 96], sizes = [8, 32], strides = [1, 1]} : vector<8x128xf32> to vector<8x32xf32>
    %134 = math.tanh %133 : vector<8x32xf32>
    %135 = arith.mulf %131, %111 : vector<8x32xf32>
    %136 = arith.mulf %130, %134 : vector<8x32xf32>
    %137 = arith.addf %135, %136 : vector<8x32xf32>
    %138 = math.tanh %137 : vector<8x32xf32>
    %139 = arith.mulf %132, %138 : vector<8x32xf32>
    %140 = arith.truncf %139 : vector<8x32xf32> to vector<8x32xbf16>
    %141 = arith.index_cast %c4_i32 : i32 to index
    %c0_43 = arith.constant 0 : index
    %c0_44 = arith.constant 0 : index
    %142 = vector.load %arg9[%141, %c0_43, %c0_44] : memref<8x8x32xbf16, #tpu.memory_space<vmem>>, vector<1x8x32xbf16>
    %143 = vector.shape_cast %142 : vector<1x8x32xbf16> to vector<8x32xbf16>
    %144 = vector.shape_cast %140 : vector<8x32xbf16> to vector<1x8x32xbf16>
    tpu.vector_store %arg9[%141, %c0_43, %c0_44], %144 {strides = array<i32>} : memref<8x8x32xbf16, #tpu.memory_space<vmem>>, vector<1x8x32xbf16>,
    %c5_i32 = arith.constant 5 : i32
    %cst_45 = arith.constant dense<0.000000e+00> : vector<8x128xf32>
    %145 = tpu.matmul %140, %1, %cst_45 {dimension_numbers = #tpu.dot_dimension_numbers<[1], [0], [0], [1], [0, 0, 1, 1], [], []>} : vector<8x32xbf16>, vector<32x128xbf16>, vector<8x128xf32> -> vector<8x128xf32>
    %146 = arith.index_cast %c5_i32 : i32 to index
    %c0_46 = arith.constant 0 : index
    %c0_47 = arith.constant 0 : index
    %147 = vector.load %arg10[%146, %c0_46, %c0_47] : memref<8x8x128xf32, #tpu.memory_space<vmem>>, vector<1x8x128xf32>
    %148 = vector.shape_cast %147 : vector<1x8x128xf32> to vector<8x128xf32>
    %149 = arith.addf %145, %148 : vector<8x128xf32>
    %150 = vector.extract_strided_slice %149 {offsets = [0, 0], sizes = [8, 96], strides = [1, 1]} : vector<8x128xf32> to vector<8x96xf32>
    %151 = arith.negf %150 : vector<8x96xf32>
    %152 = math.exp %151 : vector<8x96xf32>
    %cst_48 = arith.constant 1.000000e+00 : f32
    %153 = vector.broadcast %cst_48 : f32 to vector<8x96xf32>
    %154 = arith.addf %153, %152 : vector<8x96xf32>
    %155 = arith.divf %153, %154 : vector<8x96xf32>
    %156 = vector.extract_strided_slice %155 {offsets = [0, 0], sizes = [8, 32], strides = [1, 1]} : vector<8x96xf32> to vector<8x32xf32>
    %157 = vector.extract_strided_slice %155 {offsets = [0, 32], sizes = [8, 32], strides = [1, 1]} : vector<8x96xf32> to vector<8x32xf32>
    %158 = vector.extract_strided_slice %155 {offsets = [0, 64], sizes = [8, 32], strides = [1, 1]} : vector<8x96xf32> to vector<8x32xf32>
    %159 = vector.extract_strided_slice %149 {offsets = [0, 96], sizes = [8, 32], strides = [1, 1]} : vector<8x128xf32> to vector<8x32xf32>
    %160 = math.tanh %159 : vector<8x32xf32>
    %161 = arith.mulf %157, %137 : vector<8x32xf32>
    %162 = arith.mulf %156, %160 : vector<8x32xf32>
    %163 = arith.addf %161, %162 : vector<8x32xf32>
    %164 = math.tanh %163 : vector<8x32xf32>
    %165 = arith.mulf %158, %164 : vector<8x32xf32>
    %166 = arith.truncf %165 : vector<8x32xf32> to vector<8x32xbf16>
    %167 = arith.index_cast %c5_i32 : i32 to index
    %c0_49 = arith.constant 0 : index
    %c0_50 = arith.constant 0 : index
    %168 = vector.load %arg9[%167, %c0_49, %c0_50] : memref<8x8x32xbf16, #tpu.memory_space<vmem>>, vector<1x8x32xbf16>
    %169 = vector.shape_cast %168 : vector<1x8x32xbf16> to vector<8x32xbf16>
    %170 = vector.shape_cast %166 : vector<8x32xbf16> to vector<1x8x32xbf16>
    tpu.vector_store %arg9[%167, %c0_49, %c0_50], %170 {strides = array<i32>} : memref<8x8x32xbf16, #tpu.memory_space<vmem>>, vector<1x8x32xbf16>,
    %c6_i32 = arith.constant 6 : i32
    %cst_51 = arith.constant dense<0.000000e+00> : vector<8x128xf32>
    %171 = tpu.matmul %166, %1, %cst_51 {dimension_numbers = #tpu.dot_dimension_numbers<[1], [0], [0], [1], [0, 0, 1, 1], [], []>} : vector<8x32xbf16>, vector<32x128xbf16>, vector<8x128xf32> -> vector<8x128xf32>
    %172 = arith.index_cast %c6_i32 : i32 to index
    %c0_52 = arith.constant 0 : index
    %c0_53 = arith.constant 0 : index
    %173 = vector.load %arg10[%172, %c0_52, %c0_53] : memref<8x8x128xf32, #tpu.memory_space<vmem>>, vector<1x8x128xf32>
    %174 = vector.shape_cast %173 : vector<1x8x128xf32> to vector<8x128xf32>
    %175 = arith.addf %171, %174 : vector<8x128xf32>
    %176 = vector.extract_strided_slice %175 {offsets = [0, 0], sizes = [8, 96], strides = [1, 1]} : vector<8x128xf32> to vector<8x96xf32>
    %177 = arith.negf %176 : vector<8x96xf32>
    %178 = math.exp %177 : vector<8x96xf32>
    %cst_54 = arith.constant 1.000000e+00 : f32
    %179 = vector.broadcast %cst_54 : f32 to vector<8x96xf32>
    %180 = arith.addf %179, %178 : vector<8x96xf32>
    %181 = arith.divf %179, %180 : vector<8x96xf32>
    %182 = vector.extract_strided_slice %181 {offsets = [0, 0], sizes = [8, 32], strides = [1, 1]} : vector<8x96xf32> to vector<8x32xf32>
    %183 = vector.extract_strided_slice %181 {offsets = [0, 32], sizes = [8, 32], strides = [1, 1]} : vector<8x96xf32> to vector<8x32xf32>
    %184 = vector.extract_strided_slice %181 {offsets = [0, 64], sizes = [8, 32], strides = [1, 1]} : vector<8x96xf32> to vector<8x32xf32>
    %185 = vector.extract_strided_slice %175 {offsets = [0, 96], sizes = [8, 32], strides = [1, 1]} : vector<8x128xf32> to vector<8x32xf32>
    %186 = math.tanh %185 : vector<8x32xf32>
    %187 = arith.mulf %183, %163 : vector<8x32xf32>
    %188 = arith.mulf %182, %186 : vector<8x32xf32>
    %189 = arith.addf %187, %188 : vector<8x32xf32>
    %190 = math.tanh %189 : vector<8x32xf32>
    %191 = arith.mulf %184, %190 : vector<8x32xf32>
    %192 = arith.truncf %191 : vector<8x32xf32> to vector<8x32xbf16>
    %193 = arith.index_cast %c6_i32 : i32 to index
    %c0_55 = arith.constant 0 : index
    %c0_56 = arith.constant 0 : index
    %194 = vector.load %arg9[%193, %c0_55, %c0_56] : memref<8x8x32xbf16, #tpu.memory_space<vmem>>, vector<1x8x32xbf16>
    %195 = vector.shape_cast %194 : vector<1x8x32xbf16> to vector<8x32xbf16>
    %196 = vector.shape_cast %192 : vector<8x32xbf16> to vector<1x8x32xbf16>
    tpu.vector_store %arg9[%193, %c0_55, %c0_56], %196 {strides = array<i32>} : memref<8x8x32xbf16, #tpu.memory_space<vmem>>, vector<1x8x32xbf16>,
    %c7_i32 = arith.constant 7 : i32
    %cst_57 = arith.constant dense<0.000000e+00> : vector<8x128xf32>
    %197 = tpu.matmul %192, %1, %cst_57 {dimension_numbers = #tpu.dot_dimension_numbers<[1], [0], [0], [1], [0, 0, 1, 1], [], []>} : vector<8x32xbf16>, vector<32x128xbf16>, vector<8x128xf32> -> vector<8x128xf32>
    %198 = arith.index_cast %c7_i32 : i32 to index
    %c0_58 = arith.constant 0 : index
    %c0_59 = arith.constant 0 : index
    %199 = vector.load %arg10[%198, %c0_58, %c0_59] : memref<8x8x128xf32, #tpu.memory_space<vmem>>, vector<1x8x128xf32>
    %200 = vector.shape_cast %199 : vector<1x8x128xf32> to vector<8x128xf32>
    %201 = arith.addf %197, %200 : vector<8x128xf32>
    %202 = vector.extract_strided_slice %201 {offsets = [0, 0], sizes = [8, 96], strides = [1, 1]} : vector<8x128xf32> to vector<8x96xf32>
    %203 = arith.negf %202 : vector<8x96xf32>
    %204 = math.exp %203 : vector<8x96xf32>
    %cst_60 = arith.constant 1.000000e+00 : f32
    %205 = vector.broadcast %cst_60 : f32 to vector<8x96xf32>
    %206 = arith.addf %205, %204 : vector<8x96xf32>
    %207 = arith.divf %205, %206 : vector<8x96xf32>
    %208 = vector.extract_strided_slice %207 {offsets = [0, 0], sizes = [8, 32], strides = [1, 1]} : vector<8x96xf32> to vector<8x32xf32>
    %209 = vector.extract_strided_slice %207 {offsets = [0, 32], sizes = [8, 32], strides = [1, 1]} : vector<8x96xf32> to vector<8x32xf32>
    %210 = vector.extract_strided_slice %207 {offsets = [0, 64], sizes = [8, 32], strides = [1, 1]} : vector<8x96xf32> to vector<8x32xf32>
    %211 = vector.extract_strided_slice %201 {offsets = [0, 96], sizes = [8, 32], strides = [1, 1]} : vector<8x128xf32> to vector<8x32xf32>
    %212 = math.tanh %211 : vector<8x32xf32>
    %213 = arith.mulf %209, %189 : vector<8x32xf32>
    %214 = arith.mulf %208, %212 : vector<8x32xf32>
    %215 = arith.addf %213, %214 : vector<8x32xf32>
    %216 = math.tanh %215 : vector<8x32xf32>
    %217 = arith.mulf %210, %216 : vector<8x32xf32>
    %218 = arith.truncf %217 : vector<8x32xf32> to vector<8x32xbf16>
    %219 = arith.index_cast %c7_i32 : i32 to index
    %c0_61 = arith.constant 0 : index
    %c0_62 = arith.constant 0 : index
    %220 = vector.load %arg9[%219, %c0_61, %c0_62] : memref<8x8x32xbf16, #tpu.memory_space<vmem>>, vector<1x8x32xbf16>
    %221 = vector.shape_cast %220 : vector<1x8x32xbf16> to vector<8x32xbf16>
    %222 = vector.shape_cast %218 : vector<8x32xbf16> to vector<1x8x32xbf16>
    tpu.vector_store %arg9[%219, %c0_61, %c0_62], %222 {strides = array<i32>} : memref<8x8x32xbf16, #tpu.memory_space<vmem>>, vector<1x8x32xbf16>,
    %c8_i32 = arith.constant 8 : i32
    %c1 = arith.constant 1 : index
    %c0_63 = arith.constant 0 : index
    %c0_64 = arith.constant 0 : index
    %223 = vector.load %arg4[%c1, %c0_63, %c0_64] : memref<2x32x128xbf16, #tpu.memory_space<vmem>>, vector<1x32x128xbf16>
    %224 = vector.shape_cast %223 : vector<1x32x128xbf16> to vector<32x128xbf16>
    %c1_65 = arith.constant 1 : index
    %c0_66 = arith.constant 0 : index
    %c0_67 = arith.constant 0 : index
    %225 = vector.load %arg5[%c1_65, %c0_66, %c0_67] : memref<2x1x128xf32, #tpu.memory_space<vmem>>, vector<1x1x128xf32>
    %226 = vector.shape_cast %225 : vector<1x1x128xf32> to vector<1x128xf32>
    %c0_68 = arith.constant 0 : index
    %c0_69 = arith.constant 0 : index
    %c0_70 = arith.constant 0 : index
    %227 = vector.load %arg9[%c0_68, %c0_69, %c0_70] : memref<8x8x32xbf16, #tpu.memory_space<vmem>>, vector<8x8x32xbf16>
    %228 = vector.shape_cast %227 : vector<8x8x32xbf16> to vector<64x32xbf16>
    %c0_71 = arith.constant 0 : index
    %c0_72 = arith.constant 0 : index
    %c0_73 = arith.constant 0 : index
    %229 = vector.load %arg3[%c0_71, %c0_72, %c0_73] : memref<1x32x128xbf16, #tpu.memory_space<vmem>>, vector<1x32x128xbf16>
    %230 = vector.shape_cast %229 : vector<1x32x128xbf16> to vector<32x128xbf16>
    %cst_74 = arith.constant dense<0.000000e+00> : vector<64x128xf32>
    %231 = tpu.matmul %228, %230, %cst_74 {dimension_numbers = #tpu.dot_dimension_numbers<[1], [0], [0], [1], [0, 0, 1, 1], [], []>} : vector<64x32xbf16>, vector<32x128xbf16>, vector<64x128xf32> -> vector<64x128xf32>
    %232 = vector.broadcast %226 : vector<1x128xf32> to vector<64x128xf32>
    %233 = arith.addf %231, %232 : vector<64x128xf32>
    %234 = vector.shape_cast %233 : vector<64x128xf32> to vector<8x8x128xf32>
    %c0_75 = arith.constant 0 : index
    %c0_76 = arith.constant 0 : index
    %c0_77 = arith.constant 0 : index
    %235 = vector.load %arg10[%c0_75, %c0_76, %c0_77] : memref<8x8x128xf32, #tpu.memory_space<vmem>>, vector<8x8x128xf32>
    tpu.vector_store %arg10[%c0_75, %c0_76, %c0_77], %234 {strides = array<i32>} : memref<8x8x128xf32, #tpu.memory_space<vmem>>, vector<8x8x128xf32>,
    %cst_78 = arith.constant 0.000000e+00 : bf16
    %236 = vector.broadcast %cst_78 : bf16 to vector<8x32xbf16>
    %cst_79 = arith.constant 0.000000e+00 : f32
    %237 = vector.broadcast %cst_79 : f32 to vector<8x32xf32>
    %c0_i32_80 = arith.constant 0 : i32
    %cst_81 = arith.constant dense<0.000000e+00> : vector<8x128xf32>
    %238 = tpu.matmul %236, %224, %cst_81 {dimension_numbers = #tpu.dot_dimension_numbers<[1], [0], [0], [1], [0, 0, 1, 1], [], []>} : vector<8x32xbf16>, vector<32x128xbf16>, vector<8x128xf32> -> vector<8x128xf32>
    %239 = arith.index_cast %c0_i32_80 : i32 to index
    %c0_82 = arith.constant 0 : index
    %c0_83 = arith.constant 0 : index
    %240 = vector.load %arg10[%239, %c0_82, %c0_83] : memref<8x8x128xf32, #tpu.memory_space<vmem>>, vector<1x8x128xf32>
    %241 = vector.shape_cast %240 : vector<1x8x128xf32> to vector<8x128xf32>
    %242 = arith.addf %238, %241 : vector<8x128xf32>
    %243 = vector.extract_strided_slice %242 {offsets = [0, 0], sizes = [8, 96], strides = [1, 1]} : vector<8x128xf32> to vector<8x96xf32>
    %244 = arith.negf %243 : vector<8x96xf32>
    %245 = math.exp %244 : vector<8x96xf32>
    %cst_84 = arith.constant 1.000000e+00 : f32
    %246 = vector.broadcast %cst_84 : f32 to vector<8x96xf32>
    %247 = arith.addf %246, %245 : vector<8x96xf32>
    %248 = arith.divf %246, %247 : vector<8x96xf32>
    %249 = vector.extract_strided_slice %248 {offsets = [0, 0], sizes = [8, 32], strides = [1, 1]} : vector<8x96xf32> to vector<8x32xf32>
    %250 = vector.extract_strided_slice %248 {offsets = [0, 32], sizes = [8, 32], strides = [1, 1]} : vector<8x96xf32> to vector<8x32xf32>
    %251 = vector.extract_strided_slice %248 {offsets = [0, 64], sizes = [8, 32], strides = [1, 1]} : vector<8x96xf32> to vector<8x32xf32>
    %252 = vector.extract_strided_slice %242 {offsets = [0, 96], sizes = [8, 32], strides = [1, 1]} : vector<8x128xf32> to vector<8x32xf32>
    %253 = math.tanh %252 : vector<8x32xf32>
    %254 = arith.mulf %250, %237 : vector<8x32xf32>
    %255 = arith.mulf %249, %253 : vector<8x32xf32>
    %256 = arith.addf %254, %255 : vector<8x32xf32>
    %257 = math.tanh %256 : vector<8x32xf32>
    %258 = arith.mulf %251, %257 : vector<8x32xf32>
    %259 = arith.truncf %258 : vector<8x32xf32> to vector<8x32xbf16>
    %c1_i32_85 = arith.constant 1 : i32
    %cst_86 = arith.constant dense<0.000000e+00> : vector<8x128xf32>
    %260 = tpu.matmul %259, %224, %cst_86 {dimension_numbers = #tpu.dot_dimension_numbers<[1], [0], [0], [1], [0, 0, 1, 1], [], []>} : vector<8x32xbf16>, vector<32x128xbf16>, vector<8x128xf32> -> vector<8x128xf32>
    %261 = arith.index_cast %c1_i32_85 : i32 to index
    %c0_87 = arith.constant 0 : index
    %c0_88 = arith.constant 0 : index
    %262 = vector.load %arg10[%261, %c0_87, %c0_88] : memref<8x8x128xf32, #tpu.memory_space<vmem>>, vector<1x8x128xf32>
    %263 = vector.shape_cast %262 : vector<1x8x128xf32> to vector<8x128xf32>
    %264 = arith.addf %260, %263 : vector<8x128xf32>
    %265 = vector.extract_strided_slice %264 {offsets = [0, 0], sizes = [8, 96], strides = [1, 1]} : vector<8x128xf32> to vector<8x96xf32>
    %266 = arith.negf %265 : vector<8x96xf32>
    %267 = math.exp %266 : vector<8x96xf32>
    %cst_89 = arith.constant 1.000000e+00 : f32
    %268 = vector.broadcast %cst_89 : f32 to vector<8x96xf32>
    %269 = arith.addf %268, %267 : vector<8x96xf32>
    %270 = arith.divf %268, %269 : vector<8x96xf32>
    %271 = vector.extract_strided_slice %270 {offsets = [0, 0], sizes = [8, 32], strides = [1, 1]} : vector<8x96xf32> to vector<8x32xf32>
    %272 = vector.extract_strided_slice %270 {offsets = [0, 32], sizes = [8, 32], strides = [1, 1]} : vector<8x96xf32> to vector<8x32xf32>
    %273 = vector.extract_strided_slice %270 {offsets = [0, 64], sizes = [8, 32], strides = [1, 1]} : vector<8x96xf32> to vector<8x32xf32>
    %274 = vector.extract_strided_slice %264 {offsets = [0, 96], sizes = [8, 32], strides = [1, 1]} : vector<8x128xf32> to vector<8x32xf32>
    %275 = math.tanh %274 : vector<8x32xf32>
    %276 = arith.mulf %272, %256 : vector<8x32xf32>
    %277 = arith.mulf %271, %275 : vector<8x32xf32>
    %278 = arith.addf %276, %277 : vector<8x32xf32>
    %279 = math.tanh %278 : vector<8x32xf32>
    %280 = arith.mulf %273, %279 : vector<8x32xf32>
    %281 = arith.truncf %280 : vector<8x32xf32> to vector<8x32xbf16>
    %c2_i32_90 = arith.constant 2 : i32
    %cst_91 = arith.constant dense<0.000000e+00> : vector<8x128xf32>
    %282 = tpu.matmul %281, %224, %cst_91 {dimension_numbers = #tpu.dot_dimension_numbers<[1], [0], [0], [1], [0, 0, 1, 1], [], []>} : vector<8x32xbf16>, vector<32x128xbf16>, vector<8x128xf32> -> vector<8x128xf32>
    %283 = arith.index_cast %c2_i32_90 : i32 to index
    %c0_92 = arith.constant 0 : index
    %c0_93 = arith.constant 0 : index
    %284 = vector.load %arg10[%283, %c0_92, %c0_93] : memref<8x8x128xf32, #tpu.memory_space<vmem>>, vector<1x8x128xf32>
    %285 = vector.shape_cast %284 : vector<1x8x128xf32> to vector<8x128xf32>
    %286 = arith.addf %282, %285 : vector<8x128xf32>
    %287 = vector.extract_strided_slice %286 {offsets = [0, 0], sizes = [8, 96], strides = [1, 1]} : vector<8x128xf32> to vector<8x96xf32>
    %288 = arith.negf %287 : vector<8x96xf32>
    %289 = math.exp %288 : vector<8x96xf32>
    %cst_94 = arith.constant 1.000000e+00 : f32
    %290 = vector.broadcast %cst_94 : f32 to vector<8x96xf32>
    %291 = arith.addf %290, %289 : vector<8x96xf32>
    %292 = arith.divf %290, %291 : vector<8x96xf32>
    %293 = vector.extract_strided_slice %292 {offsets = [0, 0], sizes = [8, 32], strides = [1, 1]} : vector<8x96xf32> to vector<8x32xf32>
    %294 = vector.extract_strided_slice %292 {offsets = [0, 32], sizes = [8, 32], strides = [1, 1]} : vector<8x96xf32> to vector<8x32xf32>
    %295 = vector.extract_strided_slice %292 {offsets = [0, 64], sizes = [8, 32], strides = [1, 1]} : vector<8x96xf32> to vector<8x32xf32>
    %296 = vector.extract_strided_slice %286 {offsets = [0, 96], sizes = [8, 32], strides = [1, 1]} : vector<8x128xf32> to vector<8x32xf32>
    %297 = math.tanh %296 : vector<8x32xf32>
    %298 = arith.mulf %294, %278 : vector<8x32xf32>
    %299 = arith.mulf %293, %297 : vector<8x32xf32>
    %300 = arith.addf %298, %299 : vector<8x32xf32>
    %301 = math.tanh %300 : vector<8x32xf32>
    %302 = arith.mulf %295, %301 : vector<8x32xf32>
    %303 = arith.truncf %302 : vector<8x32xf32> to vector<8x32xbf16>
    %c3_i32_95 = arith.constant 3 : i32
    %cst_96 = arith.constant dense<0.000000e+00> : vector<8x128xf32>
    %304 = tpu.matmul %303, %224, %cst_96 {dimension_numbers = #tpu.dot_dimension_numbers<[1], [0], [0], [1], [0, 0, 1, 1], [], []>} : vector<8x32xbf16>, vector<32x128xbf16>, vector<8x128xf32> -> vector<8x128xf32>
    %305 = arith.index_cast %c3_i32_95 : i32 to index
    %c0_97 = arith.constant 0 : index
    %c0_98 = arith.constant 0 : index
    %306 = vector.load %arg10[%305, %c0_97, %c0_98] : memref<8x8x128xf32, #tpu.memory_space<vmem>>, vector<1x8x128xf32>
    %307 = vector.shape_cast %306 : vector<1x8x128xf32> to vector<8x128xf32>
    %308 = arith.addf %304, %307 : vector<8x128xf32>
    %309 = vector.extract_strided_slice %308 {offsets = [0, 0], sizes = [8, 96], strides = [1, 1]} : vector<8x128xf32> to vector<8x96xf32>
    %310 = arith.negf %309 : vector<8x96xf32>
    %311 = math.exp %310 : vector<8x96xf32>
    %cst_99 = arith.constant 1.000000e+00 : f32
    %312 = vector.broadcast %cst_99 : f32 to vector<8x96xf32>
    %313 = arith.addf %312, %311 : vector<8x96xf32>
    %314 = arith.divf %312, %313 : vector<8x96xf32>
    %315 = vector.extract_strided_slice %314 {offsets = [0, 0], sizes = [8, 32], strides = [1, 1]} : vector<8x96xf32> to vector<8x32xf32>
    %316 = vector.extract_strided_slice %314 {offsets = [0, 32], sizes = [8, 32], strides = [1, 1]} : vector<8x96xf32> to vector<8x32xf32>
    %317 = vector.extract_strided_slice %314 {offsets = [0, 64], sizes = [8, 32], strides = [1, 1]} : vector<8x96xf32> to vector<8x32xf32>
    %318 = vector.extract_strided_slice %308 {offsets = [0, 96], sizes = [8, 32], strides = [1, 1]} : vector<8x128xf32> to vector<8x32xf32>
    %319 = math.tanh %318 : vector<8x32xf32>
    %320 = arith.mulf %316, %300 : vector<8x32xf32>
    %321 = arith.mulf %315, %319 : vector<8x32xf32>
    %322 = arith.addf %320, %321 : vector<8x32xf32>
    %323 = math.tanh %322 : vector<8x32xf32>
    %324 = arith.mulf %317, %323 : vector<8x32xf32>
    %325 = arith.truncf %324 : vector<8x32xf32> to vector<8x32xbf16>
    %c4_i32_100 = arith.constant 4 : i32
    %cst_101 = arith.constant dense<0.000000e+00> : vector<8x128xf32>
    %326 = tpu.matmul %325, %224, %cst_101 {dimension_numbers = #tpu.dot_dimension_numbers<[1], [0], [0], [1], [0, 0, 1, 1], [], []>} : vector<8x32xbf16>, vector<32x128xbf16>, vector<8x128xf32> -> vector<8x128xf32>
    %327 = arith.index_cast %c4_i32_100 : i32 to index
    %c0_102 = arith.constant 0 : index
    %c0_103 = arith.constant 0 : index
    %328 = vector.load %arg10[%327, %c0_102, %c0_103] : memref<8x8x128xf32, #tpu.memory_space<vmem>>, vector<1x8x128xf32>
    %329 = vector.shape_cast %328 : vector<1x8x128xf32> to vector<8x128xf32>
    %330 = arith.addf %326, %329 : vector<8x128xf32>
    %331 = vector.extract_strided_slice %330 {offsets = [0, 0], sizes = [8, 96], strides = [1, 1]} : vector<8x128xf32> to vector<8x96xf32>
    %332 = arith.negf %331 : vector<8x96xf32>
    %333 = math.exp %332 : vector<8x96xf32>
    %cst_104 = arith.constant 1.000000e+00 : f32
    %334 = vector.broadcast %cst_104 : f32 to vector<8x96xf32>
    %335 = arith.addf %334, %333 : vector<8x96xf32>
    %336 = arith.divf %334, %335 : vector<8x96xf32>
    %337 = vector.extract_strided_slice %336 {offsets = [0, 0], sizes = [8, 32], strides = [1, 1]} : vector<8x96xf32> to vector<8x32xf32>
    %338 = vector.extract_strided_slice %336 {offsets = [0, 32], sizes = [8, 32], strides = [1, 1]} : vector<8x96xf32> to vector<8x32xf32>
    %339 = vector.extract_strided_slice %336 {offsets = [0, 64], sizes = [8, 32], strides = [1, 1]} : vector<8x96xf32> to vector<8x32xf32>
    %340 = vector.extract_strided_slice %330 {offsets = [0, 96], sizes = [8, 32], strides = [1, 1]} : vector<8x128xf32> to vector<8x32xf32>
    %341 = math.tanh %340 : vector<8x32xf32>
    %342 = arith.mulf %338, %322 : vector<8x32xf32>
    %343 = arith.mulf %337, %341 : vector<8x32xf32>
    %344 = arith.addf %342, %343 : vector<8x32xf32>
    %345 = math.tanh %344 : vector<8x32xf32>
    %346 = arith.mulf %339, %345 : vector<8x32xf32>
    %347 = arith.truncf %346 : vector<8x32xf32> to vector<8x32xbf16>
    %c5_i32_105 = arith.constant 5 : i32
    %cst_106 = arith.constant dense<0.000000e+00> : vector<8x128xf32>
    %348 = tpu.matmul %347, %224, %cst_106 {dimension_numbers = #tpu.dot_dimension_numbers<[1], [0], [0], [1], [0, 0, 1, 1], [], []>} : vector<8x32xbf16>, vector<32x128xbf16>, vector<8x128xf32> -> vector<8x128xf32>
    %349 = arith.index_cast %c5_i32_105 : i32 to index
    %c0_107 = arith.constant 0 : index
    %c0_108 = arith.constant 0 : index
    %350 = vector.load %arg10[%349, %c0_107, %c0_108] : memref<8x8x128xf32, #tpu.memory_space<vmem>>, vector<1x8x128xf32>
    %351 = vector.shape_cast %350 : vector<1x8x128xf32> to vector<8x128xf32>
    %352 = arith.addf %348, %351 : vector<8x128xf32>
    %353 = vector.extract_strided_slice %352 {offsets = [0, 0], sizes = [8, 96], strides = [1, 1]} : vector<8x128xf32> to vector<8x96xf32>
    %354 = arith.negf %353 : vector<8x96xf32>
    %355 = math.exp %354 : vector<8x96xf32>
    %cst_109 = arith.constant 1.000000e+00 : f32
    %356 = vector.broadcast %cst_109 : f32 to vector<8x96xf32>
    %357 = arith.addf %356, %355 : vector<8x96xf32>
    %358 = arith.divf %356, %357 : vector<8x96xf32>
    %359 = vector.extract_strided_slice %358 {offsets = [0, 0], sizes = [8, 32], strides = [1, 1]} : vector<8x96xf32> to vector<8x32xf32>
    %360 = vector.extract_strided_slice %358 {offsets = [0, 32], sizes = [8, 32], strides = [1, 1]} : vector<8x96xf32> to vector<8x32xf32>
    %361 = vector.extract_strided_slice %358 {offsets = [0, 64], sizes = [8, 32], strides = [1, 1]} : vector<8x96xf32> to vector<8x32xf32>
    %362 = vector.extract_strided_slice %352 {offsets = [0, 96], sizes = [8, 32], strides = [1, 1]} : vector<8x128xf32> to vector<8x32xf32>
    %363 = math.tanh %362 : vector<8x32xf32>
    %364 = arith.mulf %360, %344 : vector<8x32xf32>
    %365 = arith.mulf %359, %363 : vector<8x32xf32>
    %366 = arith.addf %364, %365 : vector<8x32xf32>
    %367 = math.tanh %366 : vector<8x32xf32>
    %368 = arith.mulf %361, %367 : vector<8x32xf32>
    %369 = arith.truncf %368 : vector<8x32xf32> to vector<8x32xbf16>
    %c6_i32_110 = arith.constant 6 : i32
    %cst_111 = arith.constant dense<0.000000e+00> : vector<8x128xf32>
    %370 = tpu.matmul %369, %224, %cst_111 {dimension_numbers = #tpu.dot_dimension_numbers<[1], [0], [0], [1], [0, 0, 1, 1], [], []>} : vector<8x32xbf16>, vector<32x128xbf16>, vector<8x128xf32> -> vector<8x128xf32>
    %371 = arith.index_cast %c6_i32_110 : i32 to index
    %c0_112 = arith.constant 0 : index
    %c0_113 = arith.constant 0 : index
    %372 = vector.load %arg10[%371, %c0_112, %c0_113] : memref<8x8x128xf32, #tpu.memory_space<vmem>>, vector<1x8x128xf32>
    %373 = vector.shape_cast %372 : vector<1x8x128xf32> to vector<8x128xf32>
    %374 = arith.addf %370, %373 : vector<8x128xf32>
    %375 = vector.extract_strided_slice %374 {offsets = [0, 0], sizes = [8, 96], strides = [1, 1]} : vector<8x128xf32> to vector<8x96xf32>
    %376 = arith.negf %375 : vector<8x96xf32>
    %377 = math.exp %376 : vector<8x96xf32>
    %cst_114 = arith.constant 1.000000e+00 : f32
    %378 = vector.broadcast %cst_114 : f32 to vector<8x96xf32>
    %379 = arith.addf %378, %377 : vector<8x96xf32>
    %380 = arith.divf %378, %379 : vector<8x96xf32>
    %381 = vector.extract_strided_slice %380 {offsets = [0, 0], sizes = [8, 32], strides = [1, 1]} : vector<8x96xf32> to vector<8x32xf32>
    %382 = vector.extract_strided_slice %380 {offsets = [0, 32], sizes = [8, 32], strides = [1, 1]} : vector<8x96xf32> to vector<8x32xf32>
    %383 = vector.extract_strided_slice %380 {offsets = [0, 64], sizes = [8, 32], strides = [1, 1]} : vector<8x96xf32> to vector<8x32xf32>
    %384 = vector.extract_strided_slice %374 {offsets = [0, 96], sizes = [8, 32], strides = [1, 1]} : vector<8x128xf32> to vector<8x32xf32>
    %385 = math.tanh %384 : vector<8x32xf32>
    %386 = arith.mulf %382, %366 : vector<8x32xf32>
    %387 = arith.mulf %381, %385 : vector<8x32xf32>
    %388 = arith.addf %386, %387 : vector<8x32xf32>
    %389 = math.tanh %388 : vector<8x32xf32>
    %390 = arith.mulf %383, %389 : vector<8x32xf32>
    %391 = arith.truncf %390 : vector<8x32xf32> to vector<8x32xbf16>
    %c7_i32_115 = arith.constant 7 : i32
    %cst_116 = arith.constant dense<0.000000e+00> : vector<8x128xf32>
    %392 = tpu.matmul %391, %224, %cst_116 {dimension_numbers = #tpu.dot_dimension_numbers<[1], [0], [0], [1], [0, 0, 1, 1], [], []>} : vector<8x32xbf16>, vector<32x128xbf16>, vector<8x128xf32> -> vector<8x128xf32>
    %393 = arith.index_cast %c7_i32_115 : i32 to index
    %c0_117 = arith.constant 0 : index
    %c0_118 = arith.constant 0 : index
    %394 = vector.load %arg10[%393, %c0_117, %c0_118] : memref<8x8x128xf32, #tpu.memory_space<vmem>>, vector<1x8x128xf32>
    %395 = vector.shape_cast %394 : vector<1x8x128xf32> to vector<8x128xf32>
    %396 = arith.addf %392, %395 : vector<8x128xf32>
    %397 = vector.extract_strided_slice %396 {offsets = [0, 0], sizes = [8, 96], strides = [1, 1]} : vector<8x128xf32> to vector<8x96xf32>
    %398 = arith.negf %397 : vector<8x96xf32>
    %399 = math.exp %398 : vector<8x96xf32>
    %cst_119 = arith.constant 1.000000e+00 : f32
    %400 = vector.broadcast %cst_119 : f32 to vector<8x96xf32>
    %401 = arith.addf %400, %399 : vector<8x96xf32>
    %402 = arith.divf %400, %401 : vector<8x96xf32>
    %403 = vector.extract_strided_slice %402 {offsets = [0, 0], sizes = [8, 32], strides = [1, 1]} : vector<8x96xf32> to vector<8x32xf32>
    %404 = vector.extract_strided_slice %402 {offsets = [0, 32], sizes = [8, 32], strides = [1, 1]} : vector<8x96xf32> to vector<8x32xf32>
    %405 = vector.extract_strided_slice %402 {offsets = [0, 64], sizes = [8, 32], strides = [1, 1]} : vector<8x96xf32> to vector<8x32xf32>
    %406 = vector.extract_strided_slice %396 {offsets = [0, 96], sizes = [8, 32], strides = [1, 1]} : vector<8x128xf32> to vector<8x32xf32>
    %407 = math.tanh %406 : vector<8x32xf32>
    %408 = arith.mulf %404, %388 : vector<8x32xf32>
    %409 = arith.mulf %403, %407 : vector<8x32xf32>
    %410 = arith.addf %408, %409 : vector<8x32xf32>
    %411 = math.tanh %410 : vector<8x32xf32>
    %412 = arith.mulf %405, %411 : vector<8x32xf32>
    %413 = arith.truncf %412 : vector<8x32xf32> to vector<8x32xbf16>
    %c8_i32_120 = arith.constant 8 : i32
    %414 = arith.extf %413 : vector<8x32xbf16> to vector<8x32xf32>
    %c0_121 = arith.constant 0 : index
    %c0_122 = arith.constant 0 : index
    %415 = vector.load %arg6[%c0_121, %c0_122] : memref<32x8xf32, #tpu.memory_space<vmem>>, vector<32x8xf32>
    %cst_123 = arith.constant dense<0.000000e+00> : vector<8x8xf32>
    %416 = tpu.matmul %414, %415, %cst_123 {dimension_numbers = #tpu.dot_dimension_numbers<[1], [0], [0], [1], [0, 0, 1, 1], [], []>} : vector<8x32xf32>, vector<32x8xf32>, vector<8x8xf32> -> vector<8x8xf32>
    %c0_124 = arith.constant 0 : index
    %c0_125 = arith.constant 0 : index
    %417 = vector.load %arg7[%c0_124, %c0_125] : memref<1x8xf32, #tpu.memory_space<vmem>>, vector<1x8xf32>
    %418 = vector.broadcast %417 : vector<1x8xf32> to vector<8x8xf32>
    %419 = arith.addf %416, %418 : vector<8x8xf32>
    %c0_126 = arith.constant 0 : index
    %c0_127 = arith.constant 0 : index
    %420 = vector.load %arg8[%c0_126, %c0_127] : memref<8x8xf32, #tpu.memory_space<vmem>>, vector<8x8xf32>
    tpu.vector_store %arg8[%c0_126, %c0_127], %419 {strides = array<i32>} : memref<8x8xf32, #tpu.memory_space<vmem>>, vector<8x8xf32>,
    return
  }
  func.func @transform_0(%arg0: i32) -> (i32, i32, i32) {
    %c0_i32 = arith.constant 0 : i32
    %c0_i32_0 = arith.constant 0 : i32
    %c0_i32_1 = arith.constant 0 : i32
    return %c0_i32, %arg0, %c0_i32_0 : i32, i32, i32
  }
  func.func @transform_1(%arg0: i32) -> (i32, i32) {
    %c0_i32 = arith.constant 0 : i32
    %c0_i32_0 = arith.constant 0 : i32
    %c0_i32_1 = arith.constant 0 : i32
    return %c0_i32, %c0_i32_0 : i32, i32
  }
  func.func @transform_2(%arg0: i32) -> (i32, i32, i32) {
    %c0_i32 = arith.constant 0 : i32
    %c0_i32_0 = arith.constant 0 : i32
    %c0_i32_1 = arith.constant 0 : i32
    %c0_i32_2 = arith.constant 0 : i32
    return %c0_i32, %c0_i32_0, %c0_i32_1 : i32, i32, i32
  }
  func.func @transform_3(%arg0: i32) -> (i32, i32, i32) {
    %c0_i32 = arith.constant 0 : i32
    %c0_i32_0 = arith.constant 0 : i32
    %c0_i32_1 = arith.constant 0 : i32
    %c0_i32_2 = arith.constant 0 : i32
    return %c0_i32, %c0_i32_0, %c0_i32_1 : i32, i32, i32
  }
  func.func @transform_4(%arg0: i32) -> (i32, i32, i32) {
    %c0_i32 = arith.constant 0 : i32
    %c0_i32_0 = arith.constant 0 : i32
    %c0_i32_1 = arith.constant 0 : i32
    %c0_i32_2 = arith.constant 0 : i32
    return %c0_i32, %c0_i32_0, %c0_i32_1 : i32, i32, i32
  }
  func.func @transform_5(%arg0: i32) -> (i32, i32) {
    %c0_i32 = arith.constant 0 : i32
    %c0_i32_0 = arith.constant 0 : i32
    %c0_i32_1 = arith.constant 0 : i32
    return %c0_i32, %c0_i32_0 : i32, i32
  }
  func.func @transform_6(%arg0: i32) -> (i32, i32) {
    %c0_i32 = arith.constant 0 : i32
    %c0_i32_0 = arith.constant 0 : i32
    %c0_i32_1 = arith.constant 0 : i32
    return %c0_i32, %c0_i32_0 : i32, i32
  }
  func.func @transform_7(%arg0: i32) -> (i32, i32) {
    %c0_i32 = arith.constant 0 : i32
    %c0_i32_0 = arith.constant 0 : i32
    return %arg0, %c0_i32 : i32, i32
  }
}

</mosaic_0001>

<llo_original>
// kernel: tpu_custom_call.1
$region0: #{tpu_custom_call.1}
  #allocation0 [shape = 'u32[]', space=smem, size = 0x4, offset = 0x4, fixed_abs, tag = 'smem constant byte address 0x4 - core index']
  #allocation1 [shape = 'u32[72,128]{1,0:T(1,128)}', space=vmem, size = 0x9000, scoped, tag = 'internal scratch']
  #allocation2 [shape = 'bf16[8,8,32]{2,1,0:T(8,128)(2,1)}', space=vmem, size = 0x4000, scoped, tag = 'scratch operand']
  #allocation3 [shape = 'f32[8,8,128]{2,1,0:T(8,128)}', space=vmem, size = 0x8000, scoped, tag = 'scratch operand']
  %s0 = inlined_call_operand.hbm [shape: f32[8,8,16], index: 0, kind: input, shape index: {}]
  %s1 = inlined_call_operand.vmem [shape: bf16[16,128], index: 1, kind: input, shape index: {}]
  %s2 = inlined_call_operand.hbm [shape: bf16[1,32,128], index: 2, kind: input, shape index: {}]
  %s3 = inlined_call_operand.vmem [shape: bf16[2,32,128], index: 3, kind: input, shape index: {}]
  %s4 = inlined_call_operand.vmem [shape: f32[2,1,128], index: 4, kind: input, shape index: {}]
  %s5 = inlined_call_operand.vmem [shape: f32[32,8], index: 5, kind: input, shape index: {}]
  %s6 = inlined_call_operand.vmem [shape: f32[1,8], index: 6, kind: input, shape index: {}]
  %s7 = inlined_call_operand.hbm [shape: f32[8,8], index: 7, kind: output, shape index: {}]
  %s8 = sld [smem:[#allocation0]]
  $region46: #{tpu_custom_call.1} parent=0
    _
  %s10 = ssub.s32 1, %s8
  %s11 = scalar_select 0, %s10, %s8
  $region1: #{tpu_custom_call.1} parent=0
    #allocation4 [shape = 'u8[32768]{0}', space=vmem, size = 0x8000, scoped, tag = 'input window, operand 0, single buffered']
    #allocation5 [shape = 's32[1]{0}', space=sflag, size = 0x4, scoped, tag = 'scoped memory for tpu_custom_call.1']
    #allocation6 [shape = 's32[1]{0}', space=sflag, size = 0x4, scoped, tag = 'scoped memory for tpu_custom_call.1']
    #allocation7 [shape = 'u8[8192]{0}', space=vmem, size = 0x2000, scoped, tag = 'input window, operand 2, single buffered']
    #allocation8 [shape = 's32[1]{0}', space=sflag, size = 0x4, scoped, tag = 'scoped memory for tpu_custom_call.1']
    #allocation9 [shape = 'u8[4096]{0}', space=vmem, size = 0x1000, scoped, tag = 'output window, operand 0, single buffered']
    %12 = vsyncpa [#allocation5], 0
    %13 = vsyncpa [#allocation8], 0
    %14 = vsyncpa [#allocation6], 0
    // Predicated region
    $region2: #{tpu_custom_call.1} parent=1 // pred_check
      _
    $region3: #{tpu_custom_call.1} parent=1 // pred_check_branch
      %16 = sbr.rel (0) target = $region5
    $region4: #{tpu_custom_call.1} parent=1 // pred_region
      %18 = vsyncadd [#allocation5], 0
      %s19 = sshll.u32 %s0, 4
      %s20 = int_to_ptr.hbm [resolvable:$true] %s19
      %s21 = sshll.u32 [#allocation4], 4
      %s22 = int_to_ptr.vmem [resolvable:$true] %s21
      %27 = dma.hbm_to_vmem [thread:$0]  %s20, 1024, %s22, [#allocation5], 128, 128, 8
    $region5: #{tpu_custom_call.1} parent=1 // pred_fallthru
      _
    // Predicated region
    $region6: #{tpu_custom_call.1} parent=1 // pred_check
      _
    $region7: #{tpu_custom_call.1} parent=1 // pred_check_branch
      %29 = sbr.rel (0) target = $region9
    $region8: #{tpu_custom_call.1} parent=1 // pred_region
      _
    $region9: #{tpu_custom_call.1} parent=1 // pred_fallthru
      _
    // Predicated region
    $region10: #{tpu_custom_call.1} parent=1 // pred_check
      _
    $region11: #{tpu_custom_call.1} parent=1 // pred_check_branch
      %31 = sbr.rel (0) target = $region13
    $region12: #{tpu_custom_call.1} parent=1 // pred_region
      %33 = vsyncadd [#allocation8], 0
      %s34 = sshll.u32 %s2, 4
      %s35 = int_to_ptr.hbm [resolvable:$true] %s34
      %s36 = sshll.u32 [#allocation7], 4
      %s37 = int_to_ptr.vmem [resolvable:$true] %s36
      %42 = dma.hbm_to_vmem [thread:$0]  %s35, 256, %s37, [#allocation8], 64, 64, 4
    $region13: #{tpu_custom_call.1} parent=1 // pred_fallthru
      _
    // Predicated region
    $region14: #{tpu_custom_call.1} parent=1 // pred_check
      _
    $region15: #{tpu_custom_call.1} parent=1 // pred_check_branch
      %44 = sbr.rel (0) target = $region17
    $region16: #{tpu_custom_call.1} parent=1 // pred_region
      _
    $region17: #{tpu_custom_call.1} parent=1 // pred_fallthru
      _
    // Predicated region
    $region18: #{tpu_custom_call.1} parent=1 // pred_check
      _
    $region19: #{tpu_custom_call.1} parent=1 // pred_check_branch
      %46 = sbr.rel (0) target = $region21
    $region20: #{tpu_custom_call.1} parent=1 // pred_region
      _
    $region21: #{tpu_custom_call.1} parent=1 // pred_fallthru
      _
    // Predicated region
    $region22: #{tpu_custom_call.1} parent=1 // pred_check
      _
    $region23: #{tpu_custom_call.1} parent=1 // pred_check_branch
      %48 = sbr.rel (0) target = $region25
    $region24: #{tpu_custom_call.1} parent=1 // pred_region
      _
    $region25: #{tpu_custom_call.1} parent=1 // pred_fallthru
      _
    // Predicated region
    $region26: #{tpu_custom_call.1} parent=1 // pred_check
      _
    $region27: #{tpu_custom_call.1} parent=1 // pred_check_branch
      %50 = sbr.rel (0) target = $region29
    $region28: #{tpu_custom_call.1} parent=1 // pred_region
      _
    $region29: #{tpu_custom_call.1} parent=1 // pred_fallthru
      _
    // Predicated region
    $region30: #{tpu_custom_call.1} parent=1 // pred_check
      _
    $region31: #{tpu_custom_call.1} parent=1 // pred_check_branch
      %52 = sbr.rel (0) target = $region33
    $region32: #{tpu_custom_call.1} parent=1 // pred_region
      %54 = dma.done [#allocation5], 1024
    $region33: #{tpu_custom_call.1} parent=1 // pred_fallthru
      _
    // Predicated region
    $region34: #{tpu_custom_call.1} parent=1 // pred_check
      _
    $region35: #{tpu_custom_call.1} parent=1 // pred_check_branch
      %56 = sbr.rel (0) target = $region37
    $region36: #{tpu_custom_call.1} parent=1 // pred_region
      %58 = dma.done [#allocation8], 256
    $region37: #{tpu_custom_call.1} parent=1 // pred_fallthru
      _
    %v60 = vld [vmem:[%s3] sm:$0xf]
    %v61 = vld [vmem:[%s3 + $0x4] sm:$0xf]
    %v62 = vld [vmem:[%s3 + $0x8] sm:$0xf]
    %v63 = vld [vmem:[%s3 + $0xc] sm:$0xf]
    %v64 = vld [vmem:[%s4] sm:$0x1]
    %v65 = vld [vmem:[#allocation4] sm:$0xff]
    %v66 = vld [vmem:[#allocation4 + $0x8] sm:$0xff]
    %v67 = vld [vmem:[#allocation4 + $0x10] sm:$0xff]
    %v68 = vld [vmem:[#allocation4 + $0x18] sm:$0xff]
    %v69 = vld [vmem:[#allocation4 + $0x20] sm:$0xff]
    %v70 = vld [vmem:[#allocation4 + $0x28] sm:$0xff]
    %v71 = vld [vmem:[#allocation4 + $0x30] sm:$0xff]
    %v72 = vld [vmem:[#allocation4 + $0x38] sm:$0xff]
    %v73 = vpack.c.bf16 %v65, %v65
    %v74 = vpack.c.bf16 %v66, %v66
    %v75 = vpack.c.bf16 %v67, %v67
    %v76 = vpack.c.bf16 %v68, %v68
    %v77 = vpack.c.bf16 %v69, %v69
    %v78 = vpack.c.bf16 %v70, %v70
    %v79 = vpack.c.bf16 %v71, %v71
    %v80 = vpack.c.bf16 %v72, %v72
    %v81 = vld [vmem:[%s1] sm:$0xf]
    %v82 = vld [vmem:[%s1 + $0x4] sm:$0xf]
    %v84 = vperm.slane %v64, 0
    %v94 = vunpack.c.l.b16 %v73
    %v95 = vunpack.c.l.b16 %v74
    %v96 = vunpack.c.l.b16 %v75
    %v97 = vunpack.c.l.b16 %v76
    %v98 = vunpack.c.l.b16 %v77
    %v99 = vunpack.c.l.b16 %v78
    %v100 = vunpack.c.l.b16 %v79
    %v101 = vunpack.c.l.b16 %v80
    %v102 = vpack.c.b16 %v95, %v94
    %v103 = vpack.c.b16 %v97, %v96
    %v104 = vpack.c.b16 %v99, %v98
    %v105 = vpack.c.b16 %v101, %v100
    %v108 = vunpack.c.l.b16 %v81
    %v109 = vunpack.c.l.b16 %v82
    %v110 = vpack.c.b16 %v109, %v108
    %vm112 = vcmask 130048
    %v114 = vsel %vm112, %v102, 0
    %v117 = vsel %vm112, %v103, 0
    %v120 = vsel %vm112, %v104, 0
    %v123 = vsel %vm112, %v105, 0
    %125 = vmatpush.bf16.msra.mxu0 0
    %126 = vmatpush.bf16.msra.mxu0 0
    %127 = vmatpush.bf16.msra.mxu0 0
    %128 = vmatpush.bf16.msra.mxu0 0
    %129 = vmatpush.bf16.msra.mxu0 0
    %130 = vmatpush.bf16.msra.mxu0 0
    %131 = vmatpush.bf16.msra.mxu0 0
    %132 = vmatpush.bf16.msra.mxu0 %v110
    %133 = vmatmul.bf16.gmra.mxu0 %v114
    %v134 = vpop.f32.mrf.mxu0
    %v135 = vadd.f32 %v84, %v134
    %v136 = vpop.f32.mrf.mxu0
    %v137 = vadd.f32 %v84, %v136
    %138 = vmatmul.bf16.gmra.mxu0 %v117
    %v139 = vpop.f32.mrf.mxu0
    %v140 = vadd.f32 %v84, %v139
    %v141 = vpop.f32.mrf.mxu0
    %v142 = vadd.f32 %v84, %v141
    %143 = vmatmul.bf16.gmra.mxu0 %v120
    %v144 = vpop.f32.mrf.mxu0
    %v145 = vadd.f32 %v84, %v144
    %v146 = vpop.f32.mrf.mxu0
    %v147 = vadd.f32 %v84, %v146
    %148 = vmatmul.bf16.gmra.mxu0 %v123
    %v149 = vpop.f32.mrf.mxu0
    %v150 = vadd.f32 %v84, %v149
    %v151 = vpop.f32.mrf.mxu0
    %v152 = vadd.f32 %v84, %v151
    %153 = vdwg.mxu0
    %154 = vst [vmem:[#allocation3] sm:$0xff] %v135
    %155 = vst [vmem:[#allocation3 + $0x8] sm:$0xff] %v137
    %156 = vst [vmem:[#allocation3 + $0x10] sm:$0xff] %v140
    %157 = vst [vmem:[#allocation3 + $0x18] sm:$0xff] %v142
    %158 = vst [vmem:[#allocation3 + $0x20] sm:$0xff] %v145
    %159 = vst [vmem:[#allocation3 + $0x28] sm:$0xff] %v147
    %160 = vst [vmem:[#allocation3 + $0x30] sm:$0xff] %v150
    %161 = vst [vmem:[#allocation3 + $0x38] sm:$0xff] %v152
    %v162 = vld [vmem:[#allocation3] sm:$0xff]
    %v167 = vunpack.c.l.b16 %v60
    %v168 = vunpack.c.l.b16 %v61
    %v169 = vunpack.c.l.b16 %v62
    %v170 = vunpack.c.l.b16 %v63
    %v171 = vpack.c.b16 %v168, %v167
    %v172 = vpack.c.b16 %v170, %v169
    %vm175 = vcmask 261120
    %v177 = vsel %vm175, 0, 0
    %179 = vmatpush.bf16.msra.mxu0 0
    %180 = vmatpush.bf16.msra.mxu0 0
    %181 = vmatpush.bf16.msra.mxu0 0
    %182 = vmatpush.bf16.msra.mxu0 0
    %183 = vmatpush.bf16.msra.mxu0 0
    %184 = vmatpush.bf16.msra.mxu0 0
    %185 = vmatpush.bf16.msra.mxu0 %v172
    %186 = vmatpush.bf16.msra.mxu0 %v171
    %187 = vmatmul.bf16.gmra.mxu0 %v177
    %v188 = vpop.f32.mrf.mxu0
    %v189 = vadd.f32 %v162, %v188
    %v190 = vpop.f32.mrf.mxu0
    %191 = vdwg.mxu0
    %v192 = vxor.u32 %v189, 2147483648
    %v193 = vmul.f32 %v192, 1.442695
    %v194 = vpow.pop %v193
    %v195 = vadd.f32 %v194, 1.0
    %v196 = vrcp.pop %v195
    %v197 = vmul.f32 %v195, %v196
    %v198 = vsub.f32 1.0, %v197
    %v199 = vmul.f32 %v196, %v198
    %v200 = vadd.f32 %v196, %v199
    %vm201 = vweird.f32 %v195
    %vm202 = vweird.f32 %v196
    %vm203 = vmor %vm201, %vm202
    %v204 = vsel %vm203, %v196, %v200
    %v205 = vand.u32 2147483647, %v195
    %vm206 = vcmp.eq.f32.partialorder %v205, 8.507059e+37
    %v207 = vand.u32 %v195, 2147483648
    %v208 = vor.u32 1.1754944e-38, %v207
    %v209 = vsel %vm206, %v208, %v204
    %v210 = vmul.f32 1.0, %v209
    %v211 = vtanh.pop %v189
    %v212 = vmul.f32 %v210, 0.0
    %214 = vrot.lane.b32.xlu0 %v211, 32
    %v215 = vpop.permute.xlu0 %214
    %v217 = vmul.f32 %v210, %v215
    %219 = vrot.lane.b32.xlu0 %v217, 32
    %v220 = vpop.permute.xlu0 %219
    %v222 = vadd.f32 %v212, %v220
    %v223 = vtanh.pop %v222
    %225 = vrot.lane.b32.xlu0 %v223, 32
    %v226 = vpop.permute.xlu0 %225
    %v228 = vmul.f32 %v210, %v226
    %v229 = vpack.c.bf16 %v228, %v228
    %231 = vrot.lane.b32.xlu0 %v229, 64
    %v232 = vpop.permute.xlu0 %231
    %vm234 = vcmask 257024
    %235 = vst.msk [vmem:[#allocation2] sm:$0xf] %vm234, %v232
    %s236 = scalar_lea.vmem [#allocation3], 8
    %v237 = vld [vmem:[%s236] sm:$0xff]
    %v238 = vunpack.c.l.b16 %v229
    %v239 = vpack.c.b16 %v238, %v238
    %240 = vrot.lane.b32.xlu0 %v239, 64
    %v241 = vpop.permute.xlu0 %240
    %v243 = vsel %vm175, %v241, 0
    %245 = vmatpush.bf16.msra.mxu0 0
    %246 = vmatpush.bf16.msra.mxu0 0
    %247 = vmatpush.bf16.msra.mxu0 0
    %248 = vmatpush.bf16.msra.mxu0 0
    %249 = vmatpush.bf16.msra.mxu0 0
    %250 = vmatpush.bf16.msra.mxu0 0
    %251 = vmatpush.bf16.msra.mxu0 %v172
    %252 = vmatpush.bf16.msra.mxu0 %v171
    %253 = vmatmul.bf16.gmra.mxu0 %v243
    %v254 = vpop.f32.mrf.mxu0
    %v255 = vadd.f32 %v237, %v254
    %v256 = vpop.f32.mrf.mxu0
    %257 = vdwg.mxu0
    %v258 = vxor.u32 %v255, 2147483648
    %v259 = vmul.f32 %v258, 1.442695
    %v260 = vpow.pop %v259
    %v261 = vadd.f32 %v260, 1.0
    %v262 = vrcp.pop %v261
    %v263 = vmul.f32 %v261, %v262
    %v264 = vsub.f32 1.0, %v263
    %v265 = vmul.f32 %v262, %v264
    %v266 = vadd.f32 %v262, %v265
    %vm267 = vweird.f32 %v261
    %vm268 = vweird.f32 %v262
    %vm269 = vmor %vm267, %vm268
    %v270 = vsel %vm269, %v262, %v266
    %v271 = vand.u32 2147483647, %v261
    %vm272 = vcmp.eq.f32.partialorder %v271, 8.507059e+37
    %v273 = vand.u32 %v261, 2147483648
    %v274 = vor.u32 1.1754944e-38, %v273
    %v275 = vsel %vm272, %v274, %v270
    %v276 = vmul.f32 1.0, %v275
    %v277 = vtanh.pop %v255
    %v278 = vmul.f32 %v276, %v222
    %280 = vrot.lane.b32.xlu0 %v277, 32
    %v281 = vpop.permute.xlu0 %280
    %v283 = vmul.f32 %v276, %v281
    %285 = vrot.lane.b32.xlu0 %v283, 32
    %v286 = vpop.permute.xlu0 %285
    %v288 = vadd.f32 %v278, %v286
    %v289 = vtanh.pop %v288
    %291 = vrot.lane.b32.xlu0 %v289, 32
    %v292 = vpop.permute.xlu0 %291
    %v294 = vmul.f32 %v276, %v292
    %v295 = vpack.c.bf16 %v294, %v294
    %297 = vrot.lane.b32.xlu0 %v295, 64
    %v298 = vpop.permute.xlu0 %297
    %s300 = scalar_lea.vmem [#allocation2], 4
    %301 = vst.msk [vmem:[%s300] sm:$0xf] %vm234, %v298
    %s302 = scalar_lea.vmem [#allocation3], 16
    %v303 = vld [vmem:[%s302] sm:$0xff]
    %v304 = vunpack.c.l.b16 %v295
    %v305 = vpack.c.b16 %v304, %v304
    %306 = vrot.lane.b32.xlu0 %v305, 64
    %v307 = vpop.permute.xlu0 %306
    %v309 = vsel %vm175, %v307, 0
    %311 = vmatpush.bf16.msra.mxu0 0
    %312 = vmatpush.bf16.msra.mxu0 0
    %313 = vmatpush.bf16.msra.mxu0 0
    %314 = vmatpush.bf16.msra.mxu0 0
    %315 = vmatpush.bf16.msra.mxu0 0
    %316 = vmatpush.bf16.msra.mxu0 0
    %317 = vmatpush.bf16.msra.mxu0 %v172
    %318 = vmatpush.bf16.msra.mxu0 %v171
    %319 = vmatmul.bf16.gmra.mxu0 %v309
    %v320 = vpop.f32.mrf.mxu0
    %v321 = vadd.f32 %v303, %v320
    %v322 = vpop.f32.mrf.mxu0
    %323 = vdwg.mxu0
    %v324 = vxor.u32 %v321, 2147483648
    %v325 = vmul.f32 %v324, 1.442695
    %v326 = vpow.pop %v325
    %v327 = vadd.f32 %v326, 1.0
    %v328 = vrcp.pop %v327
    %v329 = vmul.f32 %v327, %v328
    %v330 = vsub.f32 1.0, %v329
    %v331 = vmul.f32 %v328, %v330
    %v332 = vadd.f32 %v328, %v331
    %vm333 = vweird.f32 %v327
    %vm334 = vweird.f32 %v328
    %vm335 = vmor %vm333, %vm334
    %v336 = vsel %vm335, %v328, %v332
    %v337 = vand.u32 2147483647, %v327
    %vm338 = vcmp.eq.f32.partialorder %v337, 8.507059e+37
    %v339 = vand.u32 %v327, 2147483648
    %v340 = vor.u32 1.1754944e-38, %v339
    %v341 = vsel %vm338, %v340, %v336
    %v342 = vmul.f32 1.0, %v341
    %v343 = vtanh.pop %v321
    %v344 = vmul.f32 %v342, %v288
    %346 = vrot.lane.b32.xlu0 %v343, 32
    %v347 = vpop.permute.xlu0 %346
    %v349 = vmul.f32 %v342, %v347
    %351 = vrot.lane.b32.xlu0 %v349, 32
    %v352 = vpop.permute.xlu0 %351
    %v354 = vadd.f32 %v344, %v352
    %v355 = vtanh.pop %v354
    %357 = vrot.lane.b32.xlu0 %v355, 32
    %v358 = vpop.permute.xlu0 %357
    %v360 = vmul.f32 %v342, %v358
    %v361 = vpack.c.bf16 %v360, %v360
    %363 = vrot.lane.b32.xlu0 %v361, 64
    %v364 = vpop.permute.xlu0 %363
    %s366 = scalar_lea.vmem [#allocation2], 8
    %367 = vst.msk [vmem:[%s366] sm:$0xf] %vm234, %v364
    %s368 = scalar_lea.vmem [#allocation3], 24
    %v369 = vld [vmem:[%s368] sm:$0xff]
    %v370 = vunpack.c.l.b16 %v361
    %v371 = vpack.c.b16 %v370, %v370
    %372 = vrot.lane.b32.xlu0 %v371, 64
    %v373 = vpop.permute.xlu0 %372
    %v375 = vsel %vm175, %v373, 0
    %377 = vmatpush.bf16.msra.mxu0 0
    %378 = vmatpush.bf16.msra.mxu0 0
    %379 = vmatpush.bf16.msra.mxu0 0
    %380 = vmatpush.bf16.msra.mxu0 0
    %381 = vmatpush.bf16.msra.mxu0 0
    %382 = vmatpush.bf16.msra.mxu0 0
    %383 = vmatpush.bf16.msra.mxu0 %v172
    %384 = vmatpush.bf16.msra.mxu0 %v171
    %385 = vmatmul.bf16.gmra.mxu0 %v375
    %v386 = vpop.f32.mrf.mxu0
    %v387 = vadd.f32 %v369, %v386
    %v388 = vpop.f32.mrf.mxu0
    %389 = vdwg.mxu0
    %v390 = vxor.u32 %v387, 2147483648
    %v391 = vmul.f32 %v390, 1.442695
    %v392 = vpow.pop %v391
    %v393 = vadd.f32 %v392, 1.0
    %v394 = vrcp.pop %v393
    %v395 = vmul.f32 %v393, %v394
    %v396 = vsub.f32 1.0, %v395
    %v397 = vmul.f32 %v394, %v396
    %v398 = vadd.f32 %v394, %v397
    %vm399 = vweird.f32 %v393
    %vm400 = vweird.f32 %v394
    %vm401 = vmor %vm399, %vm400
    %v402 = vsel %vm401, %v394, %v398
    %v403 = vand.u32 2147483647, %v393
    %vm404 = vcmp.eq.f32.partialorder %v403, 8.507059e+37
    %v405 = vand.u32 %v393, 2147483648
    %v406 = vor.u32 1.1754944e-38, %v405
    %v407 = vsel %vm404, %v406, %v402
    %v408 = vmul.f32 1.0, %v407
    %v409 = vtanh.pop %v387
    %v410 = vmul.f32 %v408, %v354
    %412 = vrot.lane.b32.xlu0 %v409, 32
    %v413 = vpop.permute.xlu0 %412
    %v415 = vmul.f32 %v408, %v413
    %417 = vrot.lane.b32.xlu0 %v415, 32
    %v418 = vpop.permute.xlu0 %417
    %v420 = vadd.f32 %v410, %v418
    %v421 = vtanh.pop %v420
    %423 = vrot.lane.b32.xlu0 %v421, 32
    %v424 = vpop.permute.xlu0 %423
    %v426 = vmul.f32 %v408, %v424
    %v427 = vpack.c.bf16 %v426, %v426
    %429 = vrot.lane.b32.xlu0 %v427, 64
    %v430 = vpop.permute.xlu0 %429
    %s432 = scalar_lea.vmem [#allocation2], 12
    %433 = vst.msk [vmem:[%s432] sm:$0xf] %vm234, %v430
    %s434 = scalar_lea.vmem [#allocation3], 32
    %v435 = vld [vmem:[%s434] sm:$0xff]
    %v436 = vunpack.c.l.b16 %v427
    %v437 = vpack.c.b16 %v436, %v436
    %438 = vrot.lane.b32.xlu0 %v437, 64
    %v439 = vpop.permute.xlu0 %438
    %v441 = vsel %vm175, %v439, 0
    %443 = vmatpush.bf16.msra.mxu0 0
    %444 = vmatpush.bf16.msra.mxu0 0
    %445 = vmatpush.bf16.msra.mxu0 0
    %446 = vmatpush.bf16.msra.mxu0 0
    %447 = vmatpush.bf16.msra.mxu0 0
    %448 = vmatpush.bf16.msra.mxu0 0
    %449 = vmatpush.bf16.msra.mxu0 %v172
    %450 = vmatpush.bf16.msra.mxu0 %v171
    %451 = vmatmul.bf16.gmra.mxu0 %v441
    %v452 = vpop.f32.mrf.mxu0
    %v453 = vadd.f32 %v435, %v452
    %v454 = vpop.f32.mrf.mxu0
    %455 = vdwg.mxu0
    %v456 = vxor.u32 %v453, 2147483648
    %v457 = vmul.f32 %v456, 1.442695
    %v458 = vpow.pop %v457
    %v459 = vadd.f32 %v458, 1.0
    %v460 = vrcp.pop %v459
    %v461 = vmul.f32 %v459, %v460
    %v462 = vsub.f32 1.0, %v461
    %v463 = vmul.f32 %v460, %v462
    %v464 = vadd.f32 %v460, %v463
    %vm465 = vweird.f32 %v459
    %vm466 = vweird.f32 %v460
    %vm467 = vmor %vm465, %vm466
    %v468 = vsel %vm467, %v460, %v464
    %v469 = vand.u32 2147483647, %v459
    %vm470 = vcmp.eq.f32.partialorder %v469, 8.507059e+37
    %v471 = vand.u32 %v459, 2147483648
    %v472 = vor.u32 1.1754944e-38, %v471
    %v473 = vsel %vm470, %v472, %v468
    %v474 = vmul.f32 1.0, %v473
    %v475 = vtanh.pop %v453
    %v476 = vmul.f32 %v474, %v420
    %478 = vrot.lane.b32.xlu0 %v475, 32
    %v479 = vpop.permute.xlu0 %478
    %v481 = vmul.f32 %v474, %v479
    %483 = vrot.lane.b32.xlu0 %v481, 32
    %v484 = vpop.permute.xlu0 %483
    %v486 = vadd.f32 %v476, %v484
    %v487 = vtanh.pop %v486
    %489 = vrot.lane.b32.xlu0 %v487, 32
    %v490 = vpop.permute.xlu0 %489
    %v492 = vmul.f32 %v474, %v490
    %v493 = vpack.c.bf16 %v492, %v492
    %495 = vrot.lane.b32.xlu0 %v493, 64
    %v496 = vpop.permute.xlu0 %495
    %s498 = scalar_lea.vmem [#allocation2], 16
    %499 = vst.msk [vmem:[%s498] sm:$0xf] %vm234, %v496
    %s500 = scalar_lea.vmem [#allocation3], 40
    %v501 = vld [vmem:[%s500] sm:$0xff]
    %v502 = vunpack.c.l.b16 %v493
    %v503 = vpack.c.b16 %v502, %v502
    %504 = vrot.lane.b32.xlu0 %v503, 64
    %v505 = vpop.permute.xlu0 %504
    %v507 = vsel %vm175, %v505, 0
    %509 = vmatpush.bf16.msra.mxu0 0
    %510 = vmatpush.bf16.msra.mxu0 0
    %511 = vmatpush.bf16.msra.mxu0 0
    %512 = vmatpush.bf16.msra.mxu0 0
    %513 = vmatpush.bf16.msra.mxu0 0
    %514 = vmatpush.bf16.msra.mxu0 0
    %515 = vmatpush.bf16.msra.mxu0 %v172
    %516 = vmatpush.bf16.msra.mxu0 %v171
    %517 = vmatmul.bf16.gmra.mxu0 %v507
    %v518 = vpop.f32.mrf.mxu0
    %v519 = vadd.f32 %v501, %v518
    %v520 = vpop.f32.mrf.mxu0
    %521 = vdwg.mxu0
    %v522 = vxor.u32 %v519, 2147483648
    %v523 = vmul.f32 %v522, 1.442695
    %v524 = vpow.pop %v523
    %v525 = vadd.f32 %v524, 1.0
    %v526 = vrcp.pop %v525
    %v527 = vmul.f32 %v525, %v526
    %v528 = vsub.f32 1.0, %v527
    %v529 = vmul.f32 %v526, %v528
    %v530 = vadd.f32 %v526, %v529
    %vm531 = vweird.f32 %v525
    %vm532 = vweird.f32 %v526
    %vm533 = vmor %vm531, %vm532
    %v534 = vsel %vm533, %v526, %v530
    %v535 = vand.u32 2147483647, %v525
    %vm536 = vcmp.eq.f32.partialorder %v535, 8.507059e+37
    %v537 = vand.u32 %v525, 2147483648
    %v538 = vor.u32 1.1754944e-38, %v537
    %v539 = vsel %vm536, %v538, %v534
    %v540 = vmul.f32 1.0, %v539
    %v541 = vtanh.pop %v519
    %v542 = vmul.f32 %v540, %v486
    %544 = vrot.lane.b32.xlu0 %v541, 32
    %v545 = vpop.permute.xlu0 %544
    %v547 = vmul.f32 %v540, %v545
    %549 = vrot.lane.b32.xlu0 %v547, 32
    %v550 = vpop.permute.xlu0 %549
    %v552 = vadd.f32 %v542, %v550
    %v553 = vtanh.pop %v552
    %555 = vrot.lane.b32.xlu0 %v553, 32
    %v556 = vpop.permute.xlu0 %555
    %v558 = vmul.f32 %v540, %v556
    %v559 = vpack.c.bf16 %v558, %v558
    %561 = vrot.lane.b32.xlu0 %v559, 64
    %v562 = vpop.permute.xlu0 %561
    %s564 = scalar_lea.vmem [#allocation2], 20
    %565 = vst.msk [vmem:[%s564] sm:$0xf] %vm234, %v562
    %s566 = scalar_lea.vmem [#allocation3], 48
    %v567 = vld [vmem:[%s566] sm:$0xff]
    %v568 = vunpack.c.l.b16 %v559
    %v569 = vpack.c.b16 %v568, %v568
    %570 = vrot.lane.b32.xlu0 %v569, 64
    %v571 = vpop.permute.xlu0 %570
    %v573 = vsel %vm175, %v571, 0
    %575 = vmatpush.bf16.msra.mxu0 0
    %576 = vmatpush.bf16.msra.mxu0 0
    %577 = vmatpush.bf16.msra.mxu0 0
    %578 = vmatpush.bf16.msra.mxu0 0
    %579 = vmatpush.bf16.msra.mxu0 0
    %580 = vmatpush.bf16.msra.mxu0 0
    %581 = vmatpush.bf16.msra.mxu0 %v172
    %582 = vmatpush.bf16.msra.mxu0 %v171
    %583 = vmatmul.bf16.gmra.mxu0 %v573
    %v584 = vpop.f32.mrf.mxu0
    %v585 = vadd.f32 %v567, %v584
    %v586 = vpop.f32.mrf.mxu0
    %587 = vdwg.mxu0
    %v588 = vxor.u32 %v585, 2147483648
    %v589 = vmul.f32 %v588, 1.442695
    %v590 = vpow.pop %v589
    %v591 = vadd.f32 %v590, 1.0
    %v592 = vrcp.pop %v591
    %v593 = vmul.f32 %v591, %v592
    %v594 = vsub.f32 1.0, %v593
    %v595 = vmul.f32 %v592, %v594
    %v596 = vadd.f32 %v592, %v595
    %vm597 = vweird.f32 %v591
    %vm598 = vweird.f32 %v592
    %vm599 = vmor %vm597, %vm598
    %v600 = vsel %vm599, %v592, %v596
    %v601 = vand.u32 2147483647, %v591
    %vm602 = vcmp.eq.f32.partialorder %v601, 8.507059e+37
    %v603 = vand.u32 %v591, 2147483648
    %v604 = vor.u32 1.1754944e-38, %v603
    %v605 = vsel %vm602, %v604, %v600
    %v606 = vmul.f32 1.0, %v605
    %v607 = vtanh.pop %v585
    %v608 = vmul.f32 %v606, %v552
    %610 = vrot.lane.b32.xlu0 %v607, 32
    %v611 = vpop.permute.xlu0 %610
    %v613 = vmul.f32 %v606, %v611
    %615 = vrot.lane.b32.xlu0 %v613, 32
    %v616 = vpop.permute.xlu0 %615
    %v618 = vadd.f32 %v608, %v616
    %v619 = vtanh.pop %v618
    %621 = vrot.lane.b32.xlu0 %v619, 32
    %v622 = vpop.permute.xlu0 %621
    %v624 = vmul.f32 %v606, %v622
    %v625 = vpack.c.bf16 %v624, %v624
    %627 = vrot.lane.b32.xlu0 %v625, 64
    %v628 = vpop.permute.xlu0 %627
    %s630 = scalar_lea.vmem [#allocation2], 24
    %631 = vst.msk [vmem:[%s630] sm:$0xf] %vm234, %v628
    %s632 = scalar_lea.vmem [#allocation3], 56
    %v633 = vld [vmem:[%s632] sm:$0xff]
    %v634 = vunpack.c.l.b16 %v625
    %v635 = vpack.c.b16 %v634, %v634
    %636 = vrot.lane.b32.xlu0 %v635, 64
    %v637 = vpop.permute.xlu0 %636
    %v639 = vsel %vm175, %v637, 0
    %641 = vmatpush.bf16.msra.mxu0 0
    %642 = vmatpush.bf16.msra.mxu0 0
    %643 = vmatpush.bf16.msra.mxu0 0
    %644 = vmatpush.bf16.msra.mxu0 0
    %645 = vmatpush.bf16.msra.mxu0 0
    %646 = vmatpush.bf16.msra.mxu0 0
    %647 = vmatpush.bf16.msra.mxu0 %v172
    %648 = vmatpush.bf16.msra.mxu0 %v171
    %649 = vmatmul.bf16.gmra.mxu0 %v639
    %v650 = vpop.f32.mrf.mxu0
    %v651 = vadd.f32 %v633, %v650
    %v652 = vpop.f32.mrf.mxu0
    %653 = vdwg.mxu0
    %v654 = vxor.u32 %v651, 2147483648
    %v655 = vmul.f32 %v654, 1.442695
    %v656 = vpow.pop %v655
    %v657 = vadd.f32 %v656, 1.0
    %v658 = vrcp.pop %v657
    %v659 = vmul.f32 %v657, %v658
    %v660 = vsub.f32 1.0, %v659
    %v661 = vmul.f32 %v658, %v660
    %v662 = vadd.f32 %v658, %v661
    %vm663 = vweird.f32 %v657
    %vm664 = vweird.f32 %v658
    %vm665 = vmor %vm663, %vm664
    %v666 = vsel %vm665, %v658, %v662
    %v667 = vand.u32 2147483647, %v657
    %vm668 = vcmp.eq.f32.partialorder %v667, 8.507059e+37
    %v669 = vand.u32 %v657, 2147483648
    %v670 = vor.u32 1.1754944e-38, %v669
    %v671 = vsel %vm668, %v670, %v666
    %v672 = vmul.f32 1.0, %v671
    %v673 = vtanh.pop %v651
    %v674 = vmul.f32 %v672, %v618
    %676 = vrot.lane.b32.xlu0 %v673, 32
    %v677 = vpop.permute.xlu0 %676
    %v679 = vmul.f32 %v672, %v677
    %681 = vrot.lane.b32.xlu0 %v679, 32
    %v682 = vpop.permute.xlu0 %681
    %v684 = vadd.f32 %v674, %v682
    %v685 = vtanh.pop %v684
    %687 = vrot.lane.b32.xlu0 %v685, 32
    %v688 = vpop.permute.xlu0 %687
    %v690 = vmul.f32 %v672, %v688
    %v691 = vpack.c.bf16 %v690, %v690
    %693 = vrot.lane.b32.xlu0 %v691, 64
    %v694 = vpop.permute.xlu0 %693
    %s696 = scalar_lea.vmem [#allocation2], 28
    %697 = vst.msk [vmem:[%s696] sm:$0xf] %vm234, %v694
    %s698 = scalar_lea.vmem %s3, 16
    %v699 = vld [vmem:[%s698] sm:$0xf]
    %v700 = vld [vmem:[%s698 + $0x4] sm:$0xf]
    %v701 = vld [vmem:[%s698 + $0x8] sm:$0xf]
    %v702 = vld [vmem:[%s698 + $0xc] sm:$0xf]
    %s703 = scalar_lea.vmem %s4, 1
    %v704 = vld [vmem:[%s703] sm:$0x1]
    %v705 = vld [vmem:[#allocation2] sm:$0xf]
    %v706 = vld [vmem:[#allocation2 + $0x4] sm:$0xf]
    %v707 = vld [vmem:[#allocation2 + $0x8] sm:$0xf]
    %v708 = vld [vmem:[#allocation2 + $0xc] sm:$0xf]
    %v709 = vld [vmem:[#allocation2 + $0x10] sm:$0xf]
    %v710 = vld [vmem:[#allocation2 + $0x14] sm:$0xf]
    %v711 = vld [vmem:[#allocation2 + $0x18] sm:$0xf]
    %v712 = vld [vmem:[#allocation2 + $0x1c] sm:$0xf]
    %v713 = vld [vmem:[#allocation7] sm:$0xf]
    %v714 = vld [vmem:[#allocation7 + $0x4] sm:$0xf]
    %v715 = vld [vmem:[#allocation7 + $0x8] sm:$0xf]
    %v716 = vld [vmem:[#allocation7 + $0xc] sm:$0xf]
    %v718 = vperm.slane %v704, 0
    %v728 = vunpack.c.l.b16 %v705
    %v729 = vunpack.c.l.b16 %v706
    %v730 = vunpack.c.l.b16 %v707
    %v731 = vunpack.c.l.b16 %v708
    %v732 = vunpack.c.l.b16 %v709
    %v733 = vunpack.c.l.b16 %v710
    %v734 = vunpack.c.l.b16 %v711
    %v735 = vunpack.c.l.b16 %v712
    %v736 = vpack.c.b16 %v729, %v728
    %v737 = vpack.c.b16 %v731, %v730
    %v738 = vpack.c.b16 %v733, %v732
    %v739 = vpack.c.b16 %v735, %v734
    %v744 = vunpack.c.l.b16 %v713
    %v745 = vunpack.c.l.b16 %v714
    %v746 = vunpack.c.l.b16 %v715
    %v747 = vunpack.c.l.b16 %v716
    %v748 = vpack.c.b16 %v745, %v744
    %v749 = vpack.c.b16 %v747, %v746
    %v753 = vsel %vm175, %v736, 0
    %v756 = vsel %vm175, %v737, 0
    %v759 = vsel %vm175, %v738, 0
    %v762 = vsel %vm175, %v739, 0
    %764 = vmatpush.bf16.msra.mxu0 0
    %765 = vmatpush.bf16.msra.mxu0 0
    %766 = vmatpush.bf16.msra.mxu0 0
    %767 = vmatpush.bf16.msra.mxu0 0
    %768 = vmatpush.bf16.msra.mxu0 0
    %769 = vmatpush.bf16.msra.mxu0 0
    %770 = vmatpush.bf16.msra.mxu0 %v749
    %771 = vmatpush.bf16.msra.mxu0 %v748
    %772 = vmatmul.bf16.gmra.mxu0 %v753
    %v773 = vpop.f32.mrf.mxu0
    %v774 = vadd.f32 %v718, %v773
    %v775 = vpop.f32.mrf.mxu0
    %v776 = vadd.f32 %v718, %v775
    %777 = vmatmul.bf16.gmra.mxu0 %v756
    %v778 = vpop.f32.mrf.mxu0
    %v779 = vadd.f32 %v718, %v778
    %v780 = vpop.f32.mrf.mxu0
    %v781 = vadd.f32 %v718, %v780
    %782 = vmatmul.bf16.gmra.mxu0 %v759
    %v783 = vpop.f32.mrf.mxu0
    %v784 = vadd.f32 %v718, %v783
    %v785 = vpop.f32.mrf.mxu0
    %v786 = vadd.f32 %v718, %v785
    %787 = vmatmul.bf16.gmra.mxu0 %v762
    %v788 = vpop.f32.mrf.mxu0
    %v789 = vadd.f32 %v718, %v788
    %v790 = vpop.f32.mrf.mxu0
    %v791 = vadd.f32 %v718, %v790
    %792 = vdwg.mxu0
    %793 = vst [vmem:[#allocation3] sm:$0xff] %v774
    %794 = vst [vmem:[#allocation3 + $0x8] sm:$0xff] %v776
    %795 = vst [vmem:[#allocation3 + $0x10] sm:$0xff] %v779
    %796 = vst [vmem:[#allocation3 + $0x18] sm:$0xff] %v781
    %797 = vst [vmem:[#allocation3 + $0x20] sm:$0xff] %v784
    %798 = vst [vmem:[#allocation3 + $0x28] sm:$0xff] %v786
    %799 = vst [vmem:[#allocation3 + $0x30] sm:$0xff] %v789
    %800 = vst [vmem:[#allocation3 + $0x38] sm:$0xff] %v791
    %v801 = vld [vmem:[#allocation3] sm:$0xff]
    %v806 = vunpack.c.l.b16 %v699
    %v807 = vunpack.c.l.b16 %v700
    %v808 = vunpack.c.l.b16 %v701
    %v809 = vunpack.c.l.b16 %v702
    %v810 = vpack.c.b16 %v807, %v806
    %v811 = vpack.c.b16 %v809, %v808
    %814 = vmatpush.bf16.msra.mxu0 0
    %815 = vmatpush.bf16.msra.mxu0 0
    %816 = vmatpush.bf16.msra.mxu0 0
    %817 = vmatpush.bf16.msra.mxu0 0
    %818 = vmatpush.bf16.msra.mxu0 0
    %819 = vmatpush.bf16.msra.mxu0 0
    %820 = vmatpush.bf16.msra.mxu0 %v811
    %821 = vmatpush.bf16.msra.mxu0 %v810
    %822 = vmatmul.bf16.gmra.mxu0 %v177
    %v823 = vpop.f32.mrf.mxu0
    %v824 = vadd.f32 %v801, %v823
    %v825 = vpop.f32.mrf.mxu0
    %826 = vdwg.mxu0
    %v827 = vxor.u32 %v824, 2147483648
    %v828 = vmul.f32 %v827, 1.442695
    %v829 = vpow.pop %v828
    %v830 = vadd.f32 %v829, 1.0
    %v831 = vrcp.pop %v830
    %v832 = vmul.f32 %v830, %v831
    %v833 = vsub.f32 1.0, %v832
    %v834 = vmul.f32 %v831, %v833
    %v835 = vadd.f32 %v831, %v834
    %vm836 = vweird.f32 %v830
    %vm837 = vweird.f32 %v831
    %vm838 = vmor %vm836, %vm837
    %v839 = vsel %vm838, %v831, %v835
    %v840 = vand.u32 2147483647, %v830
    %vm841 = vcmp.eq.f32.partialorder %v840, 8.507059e+37
    %v842 = vand.u32 %v830, 2147483648
    %v843 = vor.u32 1.1754944e-38, %v842
    %v844 = vsel %vm841, %v843, %v839
    %v845 = vmul.f32 1.0, %v844
    %v846 = vtanh.pop %v824
    %v847 = vmul.f32 %v845, 0.0
    %849 = vrot.lane.b32.xlu0 %v846, 32
    %v850 = vpop.permute.xlu0 %849
    %v852 = vmul.f32 %v845, %v850
    %854 = vrot.lane.b32.xlu0 %v852, 32
    %v855 = vpop.permute.xlu0 %854
    %v857 = vadd.f32 %v847, %v855
    %v858 = vtanh.pop %v857
    %860 = vrot.lane.b32.xlu0 %v858, 32
    %v861 = vpop.permute.xlu0 %860
    %v863 = vmul.f32 %v845, %v861
    %v864 = vpack.c.bf16 %v863, %v863
    %v865 = vld [vmem:[%s236] sm:$0xff]
    %867 = vrot.lane.b32.xlu0 %v864, 64
    %v868 = vpop.permute.xlu0 %867
    %v870 = vsel %vm175, %v868, 0
    %872 = vmatpush.bf16.msra.mxu0 0
    %873 = vmatpush.bf16.msra.mxu0 0
    %874 = vmatpush.bf16.msra.mxu0 0
    %875 = vmatpush.bf16.msra.mxu0 0
    %876 = vmatpush.bf16.msra.mxu0 0
    %877 = vmatpush.bf16.msra.mxu0 0
    %878 = vmatpush.bf16.msra.mxu0 %v811
    %879 = vmatpush.bf16.msra.mxu0 %v810
    %880 = vmatmul.bf16.gmra.mxu0 %v870
    %v881 = vpop.f32.mrf.mxu0
    %v882 = vadd.f32 %v865, %v881
    %v883 = vpop.f32.mrf.mxu0
    %884 = vdwg.mxu0
    %v885 = vxor.u32 %v882, 2147483648
    %v886 = vmul.f32 %v885, 1.442695
    %v887 = vpow.pop %v886
    %v888 = vadd.f32 %v887, 1.0
    %v889 = vrcp.pop %v888
    %v890 = vmul.f32 %v888, %v889
    %v891 = vsub.f32 1.0, %v890
    %v892 = vmul.f32 %v889, %v891
    %v893 = vadd.f32 %v889, %v892
    %vm894 = vweird.f32 %v888
    %vm895 = vweird.f32 %v889
    %vm896 = vmor %vm894, %vm895
    %v897 = vsel %vm896, %v889, %v893
    %v898 = vand.u32 2147483647, %v888
    %vm899 = vcmp.eq.f32.partialorder %v898, 8.507059e+37
    %v900 = vand.u32 %v888, 2147483648
    %v901 = vor.u32 1.1754944e-38, %v900
    %v902 = vsel %vm899, %v901, %v897
    %v903 = vmul.f32 1.0, %v902
    %v904 = vtanh.pop %v882
    %v905 = vmul.f32 %v903, %v857
    %907 = vrot.lane.b32.xlu0 %v904, 32
    %v908 = vpop.permute.xlu0 %907
    %v910 = vmul.f32 %v903, %v908
    %912 = vrot.lane.b32.xlu0 %v910, 32
    %v913 = vpop.permute.xlu0 %912
    %v915 = vadd.f32 %v905, %v913
    %v916 = vtanh.pop %v915
    %918 = vrot.lane.b32.xlu0 %v916, 32
    %v919 = vpop.permute.xlu0 %918
    %v921 = vmul.f32 %v903, %v919
    %v922 = vpack.c.bf16 %v921, %v921
    %v923 = vld [vmem:[%s302] sm:$0xff]
    %925 = vrot.lane.b32.xlu0 %v922, 64
    %v926 = vpop.permute.xlu0 %925
    %v928 = vsel %vm175, %v926, 0
    %930 = vmatpush.bf16.msra.mxu0 0
    %931 = vmatpush.bf16.msra.mxu0 0
    %932 = vmatpush.bf16.msra.mxu0 0
    %933 = vmatpush.bf16.msra.mxu0 0
    %934 = vmatpush.bf16.msra.mxu0 0
    %935 = vmatpush.bf16.msra.mxu0 0
    %936 = vmatpush.bf16.msra.mxu0 %v811
    %937 = vmatpush.bf16.msra.mxu0 %v810
    %938 = vmatmul.bf16.gmra.mxu0 %v928
    %v939 = vpop.f32.mrf.mxu0
    %v940 = vadd.f32 %v923, %v939
    %v941 = vpop.f32.mrf.mxu0
    %942 = vdwg.mxu0
    %v943 = vxor.u32 %v940, 2147483648
    %v944 = vmul.f32 %v943, 1.442695
    %v945 = vpow.pop %v944
    %v946 = vadd.f32 %v945, 1.0
    %v947 = vrcp.pop %v946
    %v948 = vmul.f32 %v946, %v947
    %v949 = vsub.f32 1.0, %v948
    %v950 = vmul.f32 %v947, %v949
    %v951 = vadd.f32 %v947, %v950
    %vm952 = vweird.f32 %v946
    %vm953 = vweird.f32 %v947
    %vm954 = vmor %vm952, %vm953
    %v955 = vsel %vm954, %v947, %v951
    %v956 = vand.u32 2147483647, %v946
    %vm957 = vcmp.eq.f32.partialorder %v956, 8.507059e+37
    %v958 = vand.u32 %v946, 2147483648
    %v959 = vor.u32 1.1754944e-38, %v958
    %v960 = vsel %vm957, %v959, %v955
    %v961 = vmul.f32 1.0, %v960
    %v962 = vtanh.pop %v940
    %v963 = vmul.f32 %v961, %v915
    %965 = vrot.lane.b32.xlu0 %v962, 32
    %v966 = vpop.permute.xlu0 %965
    %v968 = vmul.f32 %v961, %v966
    %970 = vrot.lane.b32.xlu0 %v968, 32
    %v971 = vpop.permute.xlu0 %970
    %v973 = vadd.f32 %v963, %v971
    %v974 = vtanh.pop %v973
    %976 = vrot.lane.b32.xlu0 %v974, 32
    %v977 = vpop.permute.xlu0 %976
    %v979 = vmul.f32 %v961, %v977
    %v980 = vpack.c.bf16 %v979, %v979
    %v981 = vld [vmem:[%s368] sm:$0xff]
    %983 = vrot.lane.b32.xlu0 %v980, 64
    %v984 = vpop.permute.xlu0 %983
    %v986 = vsel %vm175, %v984, 0
    %988 = vmatpush.bf16.msra.mxu0 0
    %989 = vmatpush.bf16.msra.mxu0 0
    %990 = vmatpush.bf16.msra.mxu0 0
    %991 = vmatpush.bf16.msra.mxu0 0
    %992 = vmatpush.bf16.msra.mxu0 0
    %993 = vmatpush.bf16.msra.mxu0 0
    %994 = vmatpush.bf16.msra.mxu0 %v811
    %995 = vmatpush.bf16.msra.mxu0 %v810
    %996 = vmatmul.bf16.gmra.mxu0 %v986
    %v997 = vpop.f32.mrf.mxu0
    %v998 = vadd.f32 %v981, %v997
    %v999 = vpop.f32.mrf.mxu0
    %1000 = vdwg.mxu0
    %v1001 = vxor.u32 %v998, 2147483648
    %v1002 = vmul.f32 %v1001, 1.442695
    %v1003 = vpow.pop %v1002
    %v1004 = vadd.f32 %v1003, 1.0
    %v1005 = vrcp.pop %v1004
    %v1006 = vmul.f32 %v1004, %v1005
    %v1007 = vsub.f32 1.0, %v1006
    %v1008 = vmul.f32 %v1005, %v1007
    %v1009 = vadd.f32 %v1005, %v1008
    %vm1010 = vweird.f32 %v1004
    %vm1011 = vweird.f32 %v1005
    %vm1012 = vmor %vm1010, %vm1011
    %v1013 = vsel %vm1012, %v1005, %v1009
    %v1014 = vand.u32 2147483647, %v1004
    %vm1015 = vcmp.eq.f32.partialorder %v1014, 8.507059e+37
    %v1016 = vand.u32 %v1004, 2147483648
    %v1017 = vor.u32 1.1754944e-38, %v1016
    %v1018 = vsel %vm1015, %v1017, %v1013
    %v1019 = vmul.f32 1.0, %v1018
    %v1020 = vtanh.pop %v998
    %v1021 = vmul.f32 %v1019, %v973
    %1023 = vrot.lane.b32.xlu0 %v1020, 32
    %v1024 = vpop.permute.xlu0 %1023
    %v1026 = vmul.f32 %v1019, %v1024
    %1028 = vrot.lane.b32.xlu0 %v1026, 32
    %v1029 = vpop.permute.xlu0 %1028
    %v1031 = vadd.f32 %v1021, %v1029
    %v1032 = vtanh.pop %v1031
    %1034 = vrot.lane.b32.xlu0 %v1032, 32
    %v1035 = vpop.permute.xlu0 %1034
    %v1037 = vmul.f32 %v1019, %v1035
    %v1038 = vpack.c.bf16 %v1037, %v1037
    %v1039 = vld [vmem:[%s434] sm:$0xff]
    %1041 = vrot.lane.b32.xlu0 %v1038, 64
    %v1042 = vpop.permute.xlu0 %1041
    %v1044 = vsel %vm175, %v1042, 0
    %1046 = vmatpush.bf16.msra.mxu0 0
    %1047 = vmatpush.bf16.msra.mxu0 0
    %1048 = vmatpush.bf16.msra.mxu0 0
    %1049 = vmatpush.bf16.msra.mxu0 0
    %1050 = vmatpush.bf16.msra.mxu0 0
    %1051 = vmatpush.bf16.msra.mxu0 0
    %1052 = vmatpush.bf16.msra.mxu0 %v811
    %1053 = vmatpush.bf16.msra.mxu0 %v810
    %1054 = vmatmul.bf16.gmra.mxu0 %v1044
    %v1055 = vpop.f32.mrf.mxu0
    %v1056 = vadd.f32 %v1039, %v1055
    %v1057 = vpop.f32.mrf.mxu0
    %1058 = vdwg.mxu0
    %v1059 = vxor.u32 %v1056, 2147483648
    %v1060 = vmul.f32 %v1059, 1.442695
    %v1061 = vpow.pop %v1060
    %v1062 = vadd.f32 %v1061, 1.0
    %v1063 = vrcp.pop %v1062
    %v1064 = vmul.f32 %v1062, %v1063
    %v1065 = vsub.f32 1.0, %v1064
    %v1066 = vmul.f32 %v1063, %v1065
    %v1067 = vadd.f32 %v1063, %v1066
    %vm1068 = vweird.f32 %v1062
    %vm1069 = vweird.f32 %v1063
    %vm1070 = vmor %vm1068, %vm1069
    %v1071 = vsel %vm1070, %v1063, %v1067
    %v1072 = vand.u32 2147483647, %v1062
    %vm1073 = vcmp.eq.f32.partialorder %v1072, 8.507059e+37
    %v1074 = vand.u32 %v1062, 2147483648
    %v1075 = vor.u32 1.1754944e-38, %v1074
    %v1076 = vsel %vm1073, %v1075, %v1071
    %v1077 = vmul.f32 1.0, %v1076
    %v1078 = vtanh.pop %v1056
    %v1079 = vmul.f32 %v1077, %v1031
    %1081 = vrot.lane.b32.xlu0 %v1078, 32
    %v1082 = vpop.permute.xlu0 %1081
    %v1084 = vmul.f32 %v1077, %v1082
    %1086 = vrot.lane.b32.xlu0 %v1084, 32
    %v1087 = vpop.permute.xlu0 %1086
    %v1089 = vadd.f32 %v1079, %v1087
    %v1090 = vtanh.pop %v1089
    %1092 = vrot.lane.b32.xlu0 %v1090, 32
    %v1093 = vpop.permute.xlu0 %1092
    %v1095 = vmul.f32 %v1077, %v1093
    %v1096 = vpack.c.bf16 %v1095, %v1095
    %v1097 = vld [vmem:[%s500] sm:$0xff]
    %1099 = vrot.lane.b32.xlu0 %v1096, 64
    %v1100 = vpop.permute.xlu0 %1099
    %v1102 = vsel %vm175, %v1100, 0
    %1104 = vmatpush.bf16.msra.mxu0 0
    %1105 = vmatpush.bf16.msra.mxu0 0
    %1106 = vmatpush.bf16.msra.mxu0 0
    %1107 = vmatpush.bf16.msra.mxu0 0
    %1108 = vmatpush.bf16.msra.mxu0 0
    %1109 = vmatpush.bf16.msra.mxu0 0
    %1110 = vmatpush.bf16.msra.mxu0 %v811
    %1111 = vmatpush.bf16.msra.mxu0 %v810
    %1112 = vmatmul.bf16.gmra.mxu0 %v1102
    %v1113 = vpop.f32.mrf.mxu0
    %v1114 = vadd.f32 %v1097, %v1113
    %v1115 = vpop.f32.mrf.mxu0
    %1116 = vdwg.mxu0
    %v1117 = vxor.u32 %v1114, 2147483648
    %v1118 = vmul.f32 %v1117, 1.442695
    %v1119 = vpow.pop %v1118
    %v1120 = vadd.f32 %v1119, 1.0
    %v1121 = vrcp.pop %v1120
    %v1122 = vmul.f32 %v1120, %v1121
    %v1123 = vsub.f32 1.0, %v1122
    %v1124 = vmul.f32 %v1121, %v1123
    %v1125 = vadd.f32 %v1121, %v1124
    %vm1126 = vweird.f32 %v1120
    %vm1127 = vweird.f32 %v1121
    %vm1128 = vmor %vm1126, %vm1127
    %v1129 = vsel %vm1128, %v1121, %v1125
    %v1130 = vand.u32 2147483647, %v1120
    %vm1131 = vcmp.eq.f32.partialorder %v1130, 8.507059e+37
    %v1132 = vand.u32 %v1120, 2147483648
    %v1133 = vor.u32 1.1754944e-38, %v1132
    %v1134 = vsel %vm1131, %v1133, %v1129
    %v1135 = vmul.f32 1.0, %v1134
    %v1136 = vtanh.pop %v1114
    %v1137 = vmul.f32 %v1135, %v1089
    %1139 = vrot.lane.b32.xlu0 %v1136, 32
    %v1140 = vpop.permute.xlu0 %1139
    %v1142 = vmul.f32 %v1135, %v1140
    %1144 = vrot.lane.b32.xlu0 %v1142, 32
    %v1145 = vpop.permute.xlu0 %1144
    %v1147 = vadd.f32 %v1137, %v1145
    %v1148 = vtanh.pop %v1147
    %1150 = vrot.lane.b32.xlu0 %v1148, 32
    %v1151 = vpop.permute.xlu0 %1150
    %v1153 = vmul.f32 %v1135, %v1151
    %v1154 = vpack.c.bf16 %v1153, %v1153
    %v1155 = vld [vmem:[%s566] sm:$0xff]
    %1157 = vrot.lane.b32.xlu0 %v1154, 64
    %v1158 = vpop.permute.xlu0 %1157
    %v1160 = vsel %vm175, %v1158, 0
    %1162 = vmatpush.bf16.msra.mxu0 0
    %1163 = vmatpush.bf16.msra.mxu0 0
    %1164 = vmatpush.bf16.msra.mxu0 0
    %1165 = vmatpush.bf16.msra.mxu0 0
    %1166 = vmatpush.bf16.msra.mxu0 0
    %1167 = vmatpush.bf16.msra.mxu0 0
    %1168 = vmatpush.bf16.msra.mxu0 %v811
    %1169 = vmatpush.bf16.msra.mxu0 %v810
    %1170 = vmatmul.bf16.gmra.mxu0 %v1160
    %v1171 = vpop.f32.mrf.mxu0
    %v1172 = vadd.f32 %v1155, %v1171
    %v1173 = vpop.f32.mrf.mxu0
    %1174 = vdwg.mxu0
    %v1175 = vxor.u32 %v1172, 2147483648
    %v1176 = vmul.f32 %v1175, 1.442695
    %v1177 = vpow.pop %v1176
    %v1178 = vadd.f32 %v1177, 1.0
    %v1179 = vrcp.pop %v1178
    %v1180 = vmul.f32 %v1178, %v1179
    %v1181 = vsub.f32 1.0, %v1180
    %v1182 = vmul.f32 %v1179, %v1181
    %v1183 = vadd.f32 %v1179, %v1182
    %vm1184 = vweird.f32 %v1178
    %vm1185 = vweird.f32 %v1179
    %vm1186 = vmor %vm1184, %vm1185
    %v1187 = vsel %vm1186, %v1179, %v1183
    %v1188 = vand.u32 2147483647, %v1178
    %vm1189 = vcmp.eq.f32.partialorder %v1188, 8.507059e+37
    %v1190 = vand.u32 %v1178, 2147483648
    %v1191 = vor.u32 1.1754944e-38, %v1190
    %v1192 = vsel %vm1189, %v1191, %v1187
    %v1193 = vmul.f32 1.0, %v1192
    %v1194 = vtanh.pop %v1172
    %v1195 = vmul.f32 %v1193, %v1147
    %1197 = vrot.lane.b32.xlu0 %v1194, 32
    %v1198 = vpop.permute.xlu0 %1197
    %v1200 = vmul.f32 %v1193, %v1198
    %1202 = vrot.lane.b32.xlu0 %v1200, 32
    %v1203 = vpop.permute.xlu0 %1202
    %v1205 = vadd.f32 %v1195, %v1203
    %v1206 = vtanh.pop %v1205
    %1208 = vrot.lane.b32.xlu0 %v1206, 32
    %v1209 = vpop.permute.xlu0 %1208
    %v1211 = vmul.f32 %v1193, %v1209
    %v1212 = vpack.c.bf16 %v1211, %v1211
    %v1213 = vld [vmem:[%s632] sm:$0xff]
    %1215 = vrot.lane.b32.xlu0 %v1212, 64
    %v1216 = vpop.permute.xlu0 %1215
    %v1218 = vsel %vm175, %v1216, 0
    %1220 = vmatpush.bf16.msra.mxu0 0
    %1221 = vmatpush.bf16.msra.mxu0 0
    %1222 = vmatpush.bf16.msra.mxu0 0
    %1223 = vmatpush.bf16.msra.mxu0 0
    %1224 = vmatpush.bf16.msra.mxu0 0
    %1225 = vmatpush.bf16.msra.mxu0 0
    %1226 = vmatpush.bf16.msra.mxu0 %v811
    %1227 = vmatpush.bf16.msra.mxu0 %v810
    %1228 = vmatmul.bf16.gmra.mxu0 %v1218
    %v1229 = vpop.f32.mrf.mxu0
    %v1230 = vadd.f32 %v1213, %v1229
    %v1231 = vpop.f32.mrf.mxu0
    %1232 = vdwg.mxu0
    %v1233 = vxor.u32 %v1230, 2147483648
    %v1234 = vmul.f32 %v1233, 1.442695
    %v1235 = vpow.pop %v1234
    %v1236 = vadd.f32 %v1235, 1.0
    %v1237 = vrcp.pop %v1236
    %v1238 = vmul.f32 %v1236, %v1237
    %v1239 = vsub.f32 1.0, %v1238
    %v1240 = vmul.f32 %v1237, %v1239
    %v1241 = vadd.f32 %v1237, %v1240
    %vm1242 = vweird.f32 %v1236
    %vm1243 = vweird.f32 %v1237
    %vm1244 = vmor %vm1242, %vm1243
    %v1245 = vsel %vm1244, %v1237, %v1241
    %v1246 = vand.u32 2147483647, %v1236
    %vm1247 = vcmp.eq.f32.partialorder %v1246, 8.507059e+37
    %v1248 = vand.u32 %v1236, 2147483648
    %v1249 = vor.u32 1.1754944e-38, %v1248
    %v1250 = vsel %vm1247, %v1249, %v1245
    %v1251 = vmul.f32 1.0, %v1250
    %v1252 = vtanh.pop %v1230
    %v1253 = vmul.f32 %v1251, %v1205
    %1255 = vrot.lane.b32.xlu0 %v1252, 32
    %v1256 = vpop.permute.xlu0 %1255
    %v1258 = vmul.f32 %v1251, %v1256
    %1260 = vrot.lane.b32.xlu0 %v1258, 32
    %v1261 = vpop.permute.xlu0 %1260
    %v1263 = vadd.f32 %v1253, %v1261
    %v1264 = vtanh.pop %v1263
    %1266 = vrot.lane.b32.xlu0 %v1264, 32
    %v1267 = vpop.permute.xlu0 %1266
    %v1269 = vmul.f32 %v1251, %v1267
    %v1270 = vpack.c.bf16 %v1269, %v1269
    %v1271 = vunpack.c.l.bf16 %v1270
    %v1272 = vld [vmem:[%s5] sm:$0xff]
    %v1273 = vld [vmem:[%s5 + $0x8] sm:$0xff]
    %v1274 = vld [vmem:[%s5 + $0x10] sm:$0xff]
    %v1275 = vld [vmem:[%s5 + $0x18] sm:$0xff]
    %v1276 = vld [vmem:[%s6] sm:$0x1]
    %v1278 = vperm.slane %v1276, 0
    %1281 = vrot.lane.b32.xlu0 %v1271, 64
    %v1282 = vpop.permute.xlu0 %1281
    %v1283 = vsel %vm175, %v1282, 0
    %1285 = vmatpush.msra.mxu0 0.0
    %1286 = vmatpush.msra.mxu0 0.0
    %1287 = vmatpush.msra.mxu0 0.0
    %1288 = vmatpush.msra.mxu0 0.0
    %1289 = vmatpush.msra.mxu0 0.0
    %1290 = vmatpush.msra.mxu0 0.0
    %1291 = vmatpush.msra.mxu0 0.0
    %1292 = vmatpush.msra.mxu0 0.0
    %1293 = vmatpush.msra.mxu0 0.0
    %1294 = vmatpush.msra.mxu0 0.0
    %1295 = vmatpush.msra.mxu0 0.0
    %1296 = vmatpush.msra.mxu0 0.0
    %1297 = vmatpush.msra.mxu0 %v1275
    %1298 = vmatpush.msra.mxu0 %v1274
    %1299 = vmatpush.msra.mxu0 %v1273
    %1300 = vmatpush.msra.mxu0 %v1272
    %1301 = vmatmul.f32.gmra.mxu0 %v1283
    %v1302 = vpop.f32.mrf.mxu0
    %v1303 = vadd.f32 %v1278, %v1302
    %1304 = vdwg.mxu0
    %vm1305 = vcmask 64512
    %1306 = vst.msk [vmem:[#allocation9] sm:$0xff] %vm1305, %v1303
    // Predicated region
    $region38: #{tpu_custom_call.1} parent=1 // pred_check
      _
    $region39: #{tpu_custom_call.1} parent=1 // pred_check_branch
      %1308 = sbr.rel (0) target = $region41
    $region40: #{tpu_custom_call.1} parent=1 // pred_region
      %1310 = vsyncadd [#allocation6], 0
      %s1312 = sshll.u32 [#allocation9], 4
      %s1313 = int_to_ptr.vmem [resolvable:$true] %s1312
      %s1314 = sshll.u32 %s7, 4
      %s1315 = int_to_ptr.hbm [resolvable:$true] %s1314
      %1317 = dma.vmem_to_hbm [thread:$0]  %s1313, 128, %s1315, [#allocation6]
    $region41: #{tpu_custom_call.1} parent=1 // pred_fallthru
      _
    // Predicated region
    $region42: #{tpu_custom_call.1} parent=1 // pred_check
      _
    $region43: #{tpu_custom_call.1} parent=1 // pred_check_branch
      %1319 = sbr.rel (0) target = $region45
    $region44: #{tpu_custom_call.1} parent=1 // pred_region
      %1321 = dma.done [#allocation6], 128
    $region45: #{tpu_custom_call.1} parent=1 // pred_fallthru
      _
    %1322 = vsyncpa [#allocation5], 1
    %1323 = vsyncpa [#allocation8], 1
    %1324 = vsyncpa [#allocation6], 1

</llo_original>
